<compile_context>
chip_gen: v7x
topology: tpu7x:2x2x1
jax: 0.10.0
libtpu: 0.0.40
codegen_flags: <defaults>
</compile_context>

<pallas_src>
import functools

import jax
import jax.numpy as jnp
import numpy as np
from jax.experimental import pallas as pl
from jax.experimental.pallas import tpu as pltpu


def _conv_im2col_kernel(x_ref, w_ref, y_ref, psum_ref, psumsq_ref, col_ref, *,
                        k, s, hblk, w_out, cin, compute_stats):
    """One (batch, row-block) grid step of the convolution.

    x_ref:      (1, Hp, Wp, Cin)        padded NHWC input, one batch element
    w_ref:      (k*k*Cin, Cpad)         folded HWIO weight (zero-padded lanes)
    y_ref:      (1, hblk*W_out, Cpad)   conv output rows (f32, bias-less)
    psum_ref:   (1, 1, Cpad)            per-batch channel sum   (revisited)
    psumsq_ref: (1, 1, Cpad)            per-batch channel sumsq (revisited)
    col_ref:    (hblk*W_out, k*k*Cin)   im2col staging scratch (VMEM)
    """
    i = pl.program_id(1)
    rows = hblk * w_out
    row0 = i * hblk * s                 # first padded-input row for this block

    # Stage the k*k taps once into the im2col scratch, then do ONE MXU matmul
    # with contraction length k*k*Cin instead of k*k tiny (rows, Cin) matmuls.
    for kh in range(k):
        for kw in range(k):
            tap = kh * k + kw
            if s == 1:
                patch = x_ref[0, pl.ds(row0 + kh, hblk), pl.ds(kw, w_out), :]
            else:  # strided taps (s>1); demo below uses s=1
                patch = x_ref[0, pl.ds(row0 + kh, hblk, s),
                              pl.ds(kw, w_out, s), :]
            col_ref[:, tap * cin:(tap + 1) * cin] = patch.reshape(rows, cin)

    acc = jnp.dot(col_ref[...], w_ref[...],
                  preferred_element_type=jnp.float32)          # (rows, Cpad)
    y_ref[0] = acc.astype(y_ref.dtype)

    if compute_stats:
        # Per-channel partial sums for the BatchNorm batch statistics,
        # accumulated across the row-block ("arbitrary") grid axis.
        @pl.when(i == 0)
        def _():
            psum_ref[...] = jnp.zeros_like(psum_ref)
            psumsq_ref[...] = jnp.zeros_like(psumsq_ref)

        psum_ref[0] = psum_ref[0] + jnp.sum(acc, axis=0, keepdims=True)
        psumsq_ref[0] = psumsq_ref[0] + jnp.sum(acc * acc, axis=0,
                                                keepdims=True)


def _bn_act_kernel(y_ref, psum_ref, psumsq_ref, gamma_ref, beta_ref, bias_ref,
                   o_ref, *, count, eps, activation, batch_norm):
    """Finalize: fold batch stats into per-channel scale/shift, one FMA + ReLU.

    y_ref:                (1, hblk*W_out, Cpad)  conv rows (f32)
    psum_ref / psumsq_ref:(N, 1, Cpad)           per-batch channel sums
    gamma/beta/bias:      (1, Cpad)
    o_ref:                (1, hblk*W_out, Cpad)
    """
    y = y_ref[0]
    cpad = y.shape[-1]
    if batch_norm:
        inv_n = 1.0 / count
        mean = jnp.sum(psum_ref[...].reshape(-1, cpad), axis=0,
                       keepdims=True) * inv_n                   # (1, Cpad)
        ex2 = jnp.sum(psumsq_ref[...].reshape(-1, cpad), axis=0,
                      keepdims=True) * inv_n
        var = jnp.maximum(ex2 - mean * mean, 0.0)               # biased var
        scale = gamma_ref[...] * jax.lax.rsqrt(var + eps)
        shift = beta_ref[...] - mean * scale    # conv bias cancels under BN
        out = y * scale + shift
    else:
        out = y + bias_ref[...]
    if activation:
        out = jnp.maximum(out, 0.0)
    o_ref[0] = out.astype(o_ref.dtype)


def _pick_row_block(h_out, w_out, cpad, max_block_bytes=512 * 1024):
    """Largest divisor of H_out whose (rows, Cpad) f32 block fits the budget,
    preferring sublane-aligned (rows % 8 == 0) blocks."""
    best = 1
    for hb in range(1, h_out + 1):
        if h_out % hb:
            continue
        rows = hb * w_out
        if rows * cpad * 4 > max_block_bytes:
            continue
        if rows % 8 == 0 or hb == h_out:
            best = hb
    return best


def conv2d_bn_relu(x_nchw, weight_oihw, conv_bias, gamma, beta, *,
                   k, s, p, activation=True, batch_norm=True, eps=1e-5,
                   row_block=None):
    """Pallas equivalent of Conv2d(in,out,k,s,p, activation, batch_norm).forward
    (BatchNorm2d in training mode: batch statistics, biased variance)."""
    n, cin, h, w = x_nchw.shape
    cout = weight_oihw.shape[0]
    h_out = (h + 2 * p - k) // s + 1
    w_out = (w + 2 * p - k) // s + 1
    hw = h_out * w_out
    cpad = ((cout + 127) // 128) * 128          # lane-dense channel dim
    kkc = k * k * cin

    if row_block is None:
        row_block = _pick_row_block(h_out, w_out, cpad)
    assert h_out % row_block == 0, "row_block must divide H_out"
    hblk = row_block
    n_hblk = h_out // hblk
    rows = hblk * w_out

    # wrapper glue: NCHW -> NHWC transpose fused with the spatial zero-pad
    x_pad = jnp.pad(jnp.transpose(x_nchw, (0, 2, 3, 1)),
                    ((0, 0), (p, p), (p, p), (0, 0)))
    hp, wp = h + 2 * p, w + 2 * p

    # folded weight: OIHW -> (k*k*Cin, Cpad), zero-padded output channels
    w2 = jnp.transpose(weight_oihw, (2, 3, 1, 0)).reshape(kkc, cout)
    w2 = jnp.pad(w2, ((0, 0), (0, cpad - cout))).astype(x_nchw.dtype)

    def pad_c(v, fill):
        if v is None:
            v = jnp.full((cout,), fill, jnp.float32)
        v = v.astype(jnp.float32).reshape(cout)
        return jnp.pad(v, (0, cpad - cout)).reshape(1, cpad)

    gamma_p = pad_c(gamma, 1.0)
    beta_p = pad_c(beta, 0.0)
    bias_p = pad_c(conv_bias, 0.0)

    f32 = jnp.float32
    vmem_bytes = 32 * 1024 * 1024   # explicit, safe on v5e/v6e/v7x

    # ---------------- pass 1: conv (+ BN partial sums) ----------------
    conv_kern = functools.partial(
        _conv_im2col_kernel, k=k, s=s, hblk=hblk, w_out=w_out, cin=cin,
        compute_stats=batch_norm)
    conv_cost = pl.CostEstimate(
        flops=int(2 * n * hw * kkc * cout), transcendentals=0,
        bytes_accessed=int(x_pad.size * 4 + w2.size * 4
                           + n * hw * cpad * 4 + 2 * n * cpad * 4))
    y, psum, psumsq = pl.pallas_call(
        conv_kern,
        grid=(n, n_hblk),
        in_specs=[
            pl.BlockSpec((1, hp, wp, cin), lambda b, i: (b, 0, 0, 0)),
            pl.BlockSpec((kkc, cpad), lambda b, i: (0, 0)),
        ],
        out_specs=[
            pl.BlockSpec((1, rows, cpad), lambda b, i: (b, i, 0)),
            pl.BlockSpec((1, 1, cpad), lambda b, i: (b, 0, 0)),
            pl.BlockSpec((1, 1, cpad), lambda b, i: (b, 0, 0)),
        ],
        out_shape=[
            jax.ShapeDtypeStruct((n, hw, cpad), f32),
            jax.ShapeDtypeStruct((n, 1, cpad), f32),
            jax.ShapeDtypeStruct((n, 1, cpad), f32),
        ],
        scratch_shapes=[pltpu.VMEM((rows, kkc), f32)],
        compiler_params=pltpu.CompilerParams(
            dimension_semantics=("parallel", "arbitrary"),
            vmem_limit_bytes=vmem_bytes),
        cost_estimate=conv_cost,
    )(x_pad, w2)

    # ---------------- pass 2: folded BN scale/shift + ReLU ----------------
    fin_kern = functools.partial(
        _bn_act_kernel, count=float(n * hw), eps=float(eps),
        activation=activation, batch_norm=batch_norm)
    fin_cost = pl.CostEstimate(
        flops=int(3 * n * hw * cpad), transcendentals=int(cpad),
        bytes_accessed=int(2 * n * hw * cpad * 4))
    out_flat = pl.pallas_call(
        fin_kern,
        grid=(n, n_hblk),
        in_specs=[
            pl.BlockSpec((1, rows, cpad), lambda b, i: (b, i, 0)),
            pl.BlockSpec((n, 1, cpad), lambda b, i: (0, 0, 0)),
            pl.BlockSpec((n, 1, cpad), lambda b, i: (0, 0, 0)),
            pl.BlockSpec((1, cpad), lambda b, i: (0, 0)),
            pl.BlockSpec((1, cpad), lambda b, i: (0, 0)),
            pl.BlockSpec((1, cpad), lambda b, i: (0, 0)),
        ],
        out_specs=pl.BlockSpec((1, rows, cpad), lambda b, i: (b, i, 0)),
        out_shape=jax.ShapeDtypeStruct((n, hw, cpad), x_nchw.dtype),
        compiler_params=pltpu.CompilerParams(
            dimension_semantics=("parallel", "parallel"),
            vmem_limit_bytes=vmem_bytes),
        cost_estimate=fin_cost,
    )(y, psum, psumsq, gamma_p, beta_p, bias_p)

    # wrapper glue: drop channel padding, back to NCHW
    out = out_flat[:, :, :cout].reshape(n, h_out, w_out, cout)
    return jnp.transpose(out, (0, 3, 1, 2))


def _reference(x_nchw, w_oihw, cb, gamma, beta, *, k, s, p, eps,
               activation=True, batch_norm=True):
    y = jax.lax.conv_general_dilated(
        x_nchw, w_oihw, window_strides=(s, s), padding=[(p, p), (p, p)],
        dimension_numbers=('NCHW', 'OIHW', 'NCHW'))
    y = y + cb.reshape(1, -1, 1, 1)
    if batch_norm:
        mean = jnp.mean(y, axis=(0, 2, 3), keepdims=True)
        var = jnp.mean((y - mean) ** 2, axis=(0, 2, 3), keepdims=True)
        y = (y - mean) / jnp.sqrt(var + eps)
        y = y * gamma.reshape(1, -1, 1, 1) + beta.reshape(1, -1, 1, 1)
    if activation:
        y = jnp.maximum(y, 0.0)
    return y


if __name__ == "__main__":
    # Module config: Conv2d(in_channels=4, out_channels=8, k=3, s=1, p=1,
    #                       activation=True, batch_norm=True)
    N, CIN, COUT, H, W = 2, 4, 8, 16, 16
    K, S, P = 3, 1, 1
    EPS = 1e-5

    key = jax.random.PRNGKey(0)
    kx, kwt, kb, kg, kbt = jax.random.split(key, 5)
    x = jax.random.normal(kx, (N, CIN, H, W), dtype=jnp.float32)
    weight = 0.1 * jax.random.normal(kwt, (COUT, CIN, K, K), dtype=jnp.float32)
    conv_bias = 0.1 * jax.random.normal(kb, (COUT,), dtype=jnp.float32)
    gamma = 1.0 + 0.1 * jax.random.normal(kg, (COUT,), dtype=jnp.float32)
    beta = 0.1 * jax.random.normal(kbt, (COUT,), dtype=jnp.float32)

    configs = [
        dict(batch_norm=True, activation=True, row_block=None),  # auto tiling
        dict(batch_norm=True, activation=True, row_block=4),     # 4 row blocks
        dict(batch_norm=False, activation=True, row_block=8),    # no-BN path
    ]
    for cfg in configs:
        out = conv2d_bn_relu(x, weight, conv_bias, gamma, beta,
                             k=K, s=S, p=P, eps=EPS,
                             activation=cfg["activation"],
                             batch_norm=cfg["batch_norm"],
                             row_block=cfg["row_block"])
        out = jax.block_until_ready(out)
        ref = _reference(x, weight, conv_bias, gamma, beta, k=K, s=S, p=P,
                         eps=EPS, activation=cfg["activation"],
                         batch_norm=cfg["batch_norm"])
        np.testing.assert_allclose(np.asarray(out), np.asarray(ref),
                                   rtol=1e-3, atol=1e-3)

    print("KERNEL_OK")
</pallas_src>

<mosaic_0001>
module attributes {stable_mosaic.version = 11 : i64} {
  func.func @_conv_im2col_kernel(%arg0: i32, %arg1: i32, %arg2: memref<1x18x18x4xf32, #tpu.memory_space<vmem>>, %arg3: memref<36x128xf32, #tpu.memory_space<vmem>>, %arg4: memref<1x256x128xf32, #tpu.memory_space<vmem>>, %arg5: memref<1x1x128xf32, #tpu.memory_space<vmem>>, %arg6: memref<1x1x128xf32, #tpu.memory_space<vmem>>, %arg7: memref<256x36xf32, #tpu.memory_space<vmem>>) attributes {dimension_semantics = [#tpu.dimension_semantics<parallel>, #tpu.dimension_semantics<arbitrary>], iteration_bounds = array<i64: 2, 1>, scalar_prefetch = 0 : i64, scratch_operands = 1 : i64, tpu.core_type = #tpu.core_type<tc>, window_params = [{transform_indices = @transform_0, window_bounds = array<i64: 1, 18, 18, 4>}, {pipeline_mode = #tpu.pipeline_mode<synchronous>, transform_indices = @transform_1, window_bounds = array<i64: 36, 128>}, {transform_indices = @transform_2, window_bounds = array<i64: 1, 256, 128>}, {transform_indices = @transform_3, window_bounds = array<i64: 1, 1, 128>}, {transform_indices = @transform_4, window_bounds = array<i64: 1, 1, 128>}]} {
    %c16_i32 = arith.constant 16 : i32
    %0 = arith.muli %arg1, %c16_i32 : i32
    %c1_i32 = arith.constant 1 : i32
    %1 = arith.muli %0, %c1_i32 : i32
    %c0_i32 = arith.constant 0 : i32
    %2 = arith.addi %1, %c0_i32 : i32
    %c0 = arith.constant 0 : index
    %3 = arith.index_cast %2 : i32 to index
    %c0_0 = arith.constant 0 : index
    %c0_1 = arith.constant 0 : index
    %4 = vector.load %arg2[%c0, %3, %c0_0, %c0_1] : memref<1x18x18x4xf32, #tpu.memory_space<vmem>>, vector<1x16x16x4xf32>
    %5 = vector.shape_cast %4 : vector<1x16x16x4xf32> to vector<16x16x4xf32>
    %6 = vector.shape_cast %5 : vector<16x16x4xf32> to vector<256x4xf32>
    %c0_2 = arith.constant 0 : index
    %c0_3 = arith.constant 0 : index
    %7 = vector.load %arg7[%c0_2, %c0_3] : memref<256x36xf32, #tpu.memory_space<vmem>>, vector<256x4xf32>
    tpu.vector_store %arg7[%c0_2, %c0_3], %6 {strides = array<i32>} : memref<256x36xf32, #tpu.memory_space<vmem>>, vector<256x4xf32>,
    %c0_i32_4 = arith.constant 0 : i32
    %8 = arith.addi %1, %c0_i32_4 : i32
    %c0_5 = arith.constant 0 : index
    %9 = arith.index_cast %8 : i32 to index
    %c1 = arith.constant 1 : index
    %c0_6 = arith.constant 0 : index
    %10 = vector.load %arg2[%c0_5, %9, %c1, %c0_6] : memref<1x18x18x4xf32, #tpu.memory_space<vmem>>, vector<1x16x16x4xf32>
    %11 = vector.shape_cast %10 : vector<1x16x16x4xf32> to vector<16x16x4xf32>
    %12 = vector.shape_cast %11 : vector<16x16x4xf32> to vector<256x4xf32>
    %c0_7 = arith.constant 0 : index
    %c4 = arith.constant 4 : index
    %13 = vector.load %arg7[%c0_7, %c4] : memref<256x36xf32, #tpu.memory_space<vmem>>, vector<256x4xf32>
    tpu.vector_store %arg7[%c0_7, %c4], %12 {strides = array<i32>} : memref<256x36xf32, #tpu.memory_space<vmem>>, vector<256x4xf32>,
    %c0_i32_8 = arith.constant 0 : i32
    %14 = arith.addi %1, %c0_i32_8 : i32
    %c0_9 = arith.constant 0 : index
    %15 = arith.index_cast %14 : i32 to index
    %c2 = arith.constant 2 : index
    %c0_10 = arith.constant 0 : index
    %16 = vector.load %arg2[%c0_9, %15, %c2, %c0_10] : memref<1x18x18x4xf32, #tpu.memory_space<vmem>>, vector<1x16x16x4xf32>
    %17 = vector.shape_cast %16 : vector<1x16x16x4xf32> to vector<16x16x4xf32>
    %18 = vector.shape_cast %17 : vector<16x16x4xf32> to vector<256x4xf32>
    %c0_11 = arith.constant 0 : index
    %c8 = arith.constant 8 : index
    %19 = vector.load %arg7[%c0_11, %c8] : memref<256x36xf32, #tpu.memory_space<vmem>>, vector<256x4xf32>
    tpu.vector_store %arg7[%c0_11, %c8], %18 {strides = array<i32>} : memref<256x36xf32, #tpu.memory_space<vmem>>, vector<256x4xf32>,
    %c1_i32_12 = arith.constant 1 : i32
    %20 = arith.addi %1, %c1_i32_12 : i32
    %c0_13 = arith.constant 0 : index
    %21 = arith.index_cast %20 : i32 to index
    %c0_14 = arith.constant 0 : index
    %c0_15 = arith.constant 0 : index
    %22 = vector.load %arg2[%c0_13, %21, %c0_14, %c0_15] : memref<1x18x18x4xf32, #tpu.memory_space<vmem>>, vector<1x16x16x4xf32>
    %23 = vector.shape_cast %22 : vector<1x16x16x4xf32> to vector<16x16x4xf32>
    %24 = vector.shape_cast %23 : vector<16x16x4xf32> to vector<256x4xf32>
    %c0_16 = arith.constant 0 : index
    %c12 = arith.constant 12 : index
    %25 = vector.load %arg7[%c0_16, %c12] : memref<256x36xf32, #tpu.memory_space<vmem>>, vector<256x4xf32>
    tpu.vector_store %arg7[%c0_16, %c12], %24 {strides = array<i32>} : memref<256x36xf32, #tpu.memory_space<vmem>>, vector<256x4xf32>,
    %c1_i32_17 = arith.constant 1 : i32
    %26 = arith.addi %1, %c1_i32_17 : i32
    %c0_18 = arith.constant 0 : index
    %27 = arith.index_cast %26 : i32 to index
    %c1_19 = arith.constant 1 : index
    %c0_20 = arith.constant 0 : index
    %28 = vector.load %arg2[%c0_18, %27, %c1_19, %c0_20] : memref<1x18x18x4xf32, #tpu.memory_space<vmem>>, vector<1x16x16x4xf32>
    %29 = vector.shape_cast %28 : vector<1x16x16x4xf32> to vector<16x16x4xf32>
    %30 = vector.shape_cast %29 : vector<16x16x4xf32> to vector<256x4xf32>
    %c0_21 = arith.constant 0 : index
    %c16 = arith.constant 16 : index
    %31 = vector.load %arg7[%c0_21, %c16] : memref<256x36xf32, #tpu.memory_space<vmem>>, vector<256x4xf32>
    tpu.vector_store %arg7[%c0_21, %c16], %30 {strides = array<i32>} : memref<256x36xf32, #tpu.memory_space<vmem>>, vector<256x4xf32>,
    %c1_i32_22 = arith.constant 1 : i32
    %32 = arith.addi %1, %c1_i32_22 : i32
    %c0_23 = arith.constant 0 : index
    %33 = arith.index_cast %32 : i32 to index
    %c2_24 = arith.constant 2 : index
    %c0_25 = arith.constant 0 : index
    %34 = vector.load %arg2[%c0_23, %33, %c2_24, %c0_25] : memref<1x18x18x4xf32, #tpu.memory_space<vmem>>, vector<1x16x16x4xf32>
    %35 = vector.shape_cast %34 : vector<1x16x16x4xf32> to vector<16x16x4xf32>
    %36 = vector.shape_cast %35 : vector<16x16x4xf32> to vector<256x4xf32>
    %c0_26 = arith.constant 0 : index
    %c20 = arith.constant 20 : index
    %37 = vector.load %arg7[%c0_26, %c20] : memref<256x36xf32, #tpu.memory_space<vmem>>, vector<256x4xf32>
    tpu.vector_store %arg7[%c0_26, %c20], %36 {strides = array<i32>} : memref<256x36xf32, #tpu.memory_space<vmem>>, vector<256x4xf32>,
    %c2_i32 = arith.constant 2 : i32
    %38 = arith.addi %1, %c2_i32 : i32
    %c0_27 = arith.constant 0 : index
    %39 = arith.index_cast %38 : i32 to index
    %c0_28 = arith.constant 0 : index
    %c0_29 = arith.constant 0 : index
    %40 = vector.load %arg2[%c0_27, %39, %c0_28, %c0_29] : memref<1x18x18x4xf32, #tpu.memory_space<vmem>>, vector<1x16x16x4xf32>
    %41 = vector.shape_cast %40 : vector<1x16x16x4xf32> to vector<16x16x4xf32>
    %42 = vector.shape_cast %41 : vector<16x16x4xf32> to vector<256x4xf32>
    %c0_30 = arith.constant 0 : index
    %c24 = arith.constant 24 : index
    %43 = vector.load %arg7[%c0_30, %c24] : memref<256x36xf32, #tpu.memory_space<vmem>>, vector<256x4xf32>
    tpu.vector_store %arg7[%c0_30, %c24], %42 {strides = array<i32>} : memref<256x36xf32, #tpu.memory_space<vmem>>, vector<256x4xf32>,
    %c2_i32_31 = arith.constant 2 : i32
    %44 = arith.addi %1, %c2_i32_31 : i32
    %c0_32 = arith.constant 0 : index
    %45 = arith.index_cast %44 : i32 to index
    %c1_33 = arith.constant 1 : index
    %c0_34 = arith.constant 0 : index
    %46 = vector.load %arg2[%c0_32, %45, %c1_33, %c0_34] : memref<1x18x18x4xf32, #tpu.memory_space<vmem>>, vector<1x16x16x4xf32>
    %47 = vector.shape_cast %46 : vector<1x16x16x4xf32> to vector<16x16x4xf32>
    %48 = vector.shape_cast %47 : vector<16x16x4xf32> to vector<256x4xf32>
    %c0_35 = arith.constant 0 : index
    %c28 = arith.constant 28 : index
    %49 = vector.load %arg7[%c0_35, %c28] : memref<256x36xf32, #tpu.memory_space<vmem>>, vector<256x4xf32>
    tpu.vector_store %arg7[%c0_35, %c28], %48 {strides = array<i32>} : memref<256x36xf32, #tpu.memory_space<vmem>>, vector<256x4xf32>,
    %c2_i32_36 = arith.constant 2 : i32
    %50 = arith.addi %1, %c2_i32_36 : i32
    %c0_37 = arith.constant 0 : index
    %51 = arith.index_cast %50 : i32 to index
    %c2_38 = arith.constant 2 : index
    %c0_39 = arith.constant 0 : index
    %52 = vector.load %arg2[%c0_37, %51, %c2_38, %c0_39] : memref<1x18x18x4xf32, #tpu.memory_space<vmem>>, vector<1x16x16x4xf32>
    %53 = vector.shape_cast %52 : vector<1x16x16x4xf32> to vector<16x16x4xf32>
    %54 = vector.shape_cast %53 : vector<16x16x4xf32> to vector<256x4xf32>
    %c0_40 = arith.constant 0 : index
    %c32 = arith.constant 32 : index
    %55 = vector.load %arg7[%c0_40, %c32] : memref<256x36xf32, #tpu.memory_space<vmem>>, vector<256x4xf32>
    tpu.vector_store %arg7[%c0_40, %c32], %54 {strides = array<i32>} : memref<256x36xf32, #tpu.memory_space<vmem>>, vector<256x4xf32>,
    %c0_41 = arith.constant 0 : index
    %c0_42 = arith.constant 0 : index
    %56 = vector.load %arg7[%c0_41, %c0_42] : memref<256x36xf32, #tpu.memory_space<vmem>>, vector<256x36xf32>
    %c0_43 = arith.constant 0 : index
    %c0_44 = arith.constant 0 : index
    %57 = vector.load %arg3[%c0_43, %c0_44] : memref<36x128xf32, #tpu.memory_space<vmem>>, vector<36x128xf32>
    %cst = arith.constant dense<0.000000e+00> : vector<256x128xf32>
    %58 = tpu.matmul %56, %57, %cst {dimension_numbers = #tpu.dot_dimension_numbers<[1], [0], [0], [1], [0, 0, 1, 1], [], []>} : vector<256x36xf32>, vector<36x128xf32>, vector<256x128xf32> -> vector<256x128xf32>
    %c0_45 = arith.constant 0 : index
    %c0_46 = arith.constant 0 : index
    %c0_47 = arith.constant 0 : index
    %59 = vector.load %arg4[%c0_45, %c0_46, %c0_47] : memref<1x256x128xf32, #tpu.memory_space<vmem>>, vector<1x256x128xf32>
    %60 = vector.shape_cast %59 : vector<1x256x128xf32> to vector<256x128xf32>
    %61 = vector.shape_cast %58 : vector<256x128xf32> to vector<1x256x128xf32>
    tpu.vector_store %arg4[%c0_45, %c0_46, %c0_47], %61 {strides = array<i32>} : memref<1x256x128xf32, #tpu.memory_space<vmem>>, vector<1x256x128xf32>,
    %c0_i32_48 = arith.constant 0 : i32
    %62 = arith.cmpi eq, %arg1, %c0_i32_48 : i32
    %63 = arith.extui %62 : i1 to i32
    %c0_i32_49 = arith.constant 0 : i32
    %64 = arith.cmpi ne, %63, %c0_i32_49 : i32
    scf.if %64 {
      %cst_64 = arith.constant 0.000000e+00 : f32
      %82 = vector.broadcast %cst_64 : f32 to vector<1x1x128xf32>
      %c0_65 = arith.constant 0 : index
      %c0_66 = arith.constant 0 : index
      %c0_67 = arith.constant 0 : index
      %83 = vector.load %arg5[%c0_65, %c0_66, %c0_67] : memref<1x1x128xf32, #tpu.memory_space<vmem>>, vector<1x1x128xf32>
      tpu.vector_store %arg5[%c0_65, %c0_66, %c0_67], %82 {strides = array<i32>} : memref<1x1x128xf32, #tpu.memory_space<vmem>>, vector<1x1x128xf32>,
      %cst_68 = arith.constant 0.000000e+00 : f32
      %84 = vector.broadcast %cst_68 : f32 to vector<1x1x128xf32>
      %c0_69 = arith.constant 0 : index
      %c0_70 = arith.constant 0 : index
      %c0_71 = arith.constant 0 : index
      %85 = vector.load %arg6[%c0_69, %c0_70, %c0_71] : memref<1x1x128xf32, #tpu.memory_space<vmem>>, vector<1x1x128xf32>
      tpu.vector_store %arg6[%c0_69, %c0_70, %c0_71], %84 {strides = array<i32>} : memref<1x1x128xf32, #tpu.memory_space<vmem>>, vector<1x1x128xf32>,
    } else {
    }
    %c0_50 = arith.constant 0 : index
    %c0_51 = arith.constant 0 : index
    %c0_52 = arith.constant 0 : index
    %65 = vector.load %arg5[%c0_50, %c0_51, %c0_52] : memref<1x1x128xf32, #tpu.memory_space<vmem>>, vector<1x1x128xf32>
    %66 = vector.shape_cast %65 : vector<1x1x128xf32> to vector<1x128xf32>
    %cst_53 = arith.constant dense<0.000000e+00> : vector<128xf32>
    %67 = vector.multi_reduction <add>, %58, %cst_53 [0] : vector<256x128xf32> to vector<128xf32>
    %68 = vector.shape_cast %67 : vector<128xf32> to vector<1x128xf32>
    %69 = arith.addf %66, %68 : vector<1x128xf32>
    %c0_54 = arith.constant 0 : index
    %c0_55 = arith.constant 0 : index
    %c0_56 = arith.constant 0 : index
    %70 = vector.load %arg5[%c0_54, %c0_55, %c0_56] : memref<1x1x128xf32, #tpu.memory_space<vmem>>, vector<1x1x128xf32>
    %71 = vector.shape_cast %70 : vector<1x1x128xf32> to vector<1x128xf32>
    %72 = vector.shape_cast %69 : vector<1x128xf32> to vector<1x1x128xf32>
    tpu.vector_store %arg5[%c0_54, %c0_55, %c0_56], %72 {strides = array<i32>} : memref<1x1x128xf32, #tpu.memory_space<vmem>>, vector<1x1x128xf32>,
    %c0_57 = arith.constant 0 : index
    %c0_58 = arith.constant 0 : index
    %c0_59 = arith.constant 0 : index
    %73 = vector.load %arg6[%c0_57, %c0_58, %c0_59] : memref<1x1x128xf32, #tpu.memory_space<vmem>>, vector<1x1x128xf32>
    %74 = vector.shape_cast %73 : vector<1x1x128xf32> to vector<1x128xf32>
    %75 = arith.mulf %58, %58 : vector<256x128xf32>
    %cst_60 = arith.constant dense<0.000000e+00> : vector<128xf32>
    %76 = vector.multi_reduction <add>, %75, %cst_60 [0] : vector<256x128xf32> to vector<128xf32>
    %77 = vector.shape_cast %76 : vector<128xf32> to vector<1x128xf32>
    %78 = arith.addf %74, %77 : vector<1x128xf32>
    %c0_61 = arith.constant 0 : index
    %c0_62 = arith.constant 0 : index
    %c0_63 = arith.constant 0 : index
    %79 = vector.load %arg6[%c0_61, %c0_62, %c0_63] : memref<1x1x128xf32, #tpu.memory_space<vmem>>, vector<1x1x128xf32>
    %80 = vector.shape_cast %79 : vector<1x1x128xf32> to vector<1x128xf32>
    %81 = vector.shape_cast %78 : vector<1x128xf32> to vector<1x1x128xf32>
    tpu.vector_store %arg6[%c0_61, %c0_62, %c0_63], %81 {strides = array<i32>} : memref<1x1x128xf32, #tpu.memory_space<vmem>>, vector<1x1x128xf32>,
    return
  }
  func.func @transform_0(%arg0: i32, %arg1: i32) -> (i32, i32, i32, i32) {
    %c0_i32 = arith.constant 0 : i32
    %c0_i32_0 = arith.constant 0 : i32
    %c0_i32_1 = arith.constant 0 : i32
    %c0_i32_2 = arith.constant 0 : i32
    return %arg0, %c0_i32, %c0_i32_0, %c0_i32_1 : i32, i32, i32, i32
  }
  func.func @transform_1(%arg0: i32, %arg1: i32) -> (i32, i32) {
    %c0_i32 = arith.constant 0 : i32
    %c0_i32_0 = arith.constant 0 : i32
    %c0_i32_1 = arith.constant 0 : i32
    return %c0_i32, %c0_i32_0 : i32, i32
  }
  func.func @transform_2(%arg0: i32, %arg1: i32) -> (i32, i32, i32) {
    %c0_i32 = arith.constant 0 : i32
    %c0_i32_0 = arith.constant 0 : i32
    return %arg0, %arg1, %c0_i32 : i32, i32, i32
  }
  func.func @transform_3(%arg0: i32, %arg1: i32) -> (i32, i32, i32) {
    %c0_i32 = arith.constant 0 : i32
    %c0_i32_0 = arith.constant 0 : i32
    %c0_i32_1 = arith.constant 0 : i32
    return %arg0, %c0_i32, %c0_i32_0 : i32, i32, i32
  }
  func.func @transform_4(%arg0: i32, %arg1: i32) -> (i32, i32, i32) {
    %c0_i32 = arith.constant 0 : i32
    %c0_i32_0 = arith.constant 0 : i32
    %c0_i32_1 = arith.constant 0 : i32
    return %arg0, %c0_i32, %c0_i32_0 : i32, i32, i32
  }
}

</mosaic_0001>

<llo_original>
// kernel: tpu_custom_call.1
$region0: #{tpu_custom_call.1}
  #allocation0 [shape = 'u32[]', space=smem, size = 0x4, offset = 0x4, fixed_abs, tag = 'smem constant byte address 0x4 - core index']
  #allocation1 [shape = 'u32[144,128]{1,0:T(1,128)}', space=vmem, size = 0x12000, scoped, tag = 'internal scratch']
  #allocation2 [shape = 'f32[256,36]{1,0:T(8,128)}', space=vmem, size = 0x20000, scoped, tag = 'scratch operand']
  %s0 = inlined_call_operand.vmem [shape: f32[2,18,18,4], index: 0, kind: input, shape index: {}]
  %s1 = inlined_call_operand.vmem [shape: f32[36,128], index: 1, kind: input, shape index: {}]
  %s2 = inlined_call_operand.hbm [shape: f32[2,256,128], index: 2, kind: output, shape index: {0}]
  %s3 = inlined_call_operand.hbm [shape: f32[2,1,128], index: 3, kind: output, shape index: {1}]
  %s4 = inlined_call_operand.hbm [shape: f32[2,1,128], index: 4, kind: output, shape index: {2}]
  %5 = xla_tuple %s2, %s3, %s4
  %s6 = sld [smem:[#allocation0]]
  $region61: #{tpu_custom_call.1} parent=0
    _
  %s8 = ssub.s32 1, %s6
  %s9 = scalar_select 0, %s8, %s6
  $region1: #{tpu_custom_call.1} parent=0
    #allocation3 [shape = 'u8[262144]{0}', space=vmem, size = 0x40000, scoped, tag = 'output window, operand 0']
    #allocation4 [shape = 's32[2]{0}', space=sflag, size = 0x8, scoped, tag = 'scoped memory for tpu_custom_call.1']
    #allocation5 [shape = 'u8[1024]{0}', space=vmem, size = 0x400, scoped, tag = 'output window, operand 1']
    #allocation6 [shape = 's32[2]{0}', space=sflag, size = 0x8, scoped, tag = 'scoped memory for tpu_custom_call.1']
    #allocation7 [shape = 'u8[1024]{0}', space=vmem, size = 0x400, scoped, tag = 'output window, operand 2']
    %10 = vsyncpa [#allocation4], 0
    %s11 = scalar_lea.sflag [#allocation4], 1
    %12 = vsyncpa %s11, 0
    %13 = vsyncpa [#allocation6], 0
    %s14 = scalar_lea.sflag [#allocation6], 1
    %15 = vsyncpa %s14, 0
    loop: start=0, step=1, limit=4
    $region2: #{tpu_custom_call.1} parent=1 // loop_pre_header
      _
    $region3: #{tpu_custom_call.1} parent=1 // loop_header
      %s17 = sphi 0, %s21
      %p18 = scmp.ge.s32.totalorder %s17, 4
      %s24 = sphi 0, %s36
      %s25 = sphi 0, %s32
      %s26 = sphi 0, %s24
      %s27 = sphi 0, %s25
      %s28 = sphi 0, %s26
      %s29 = sphi 0, %s27
      %s39 = sphi 0, %s41
      %s42 = sphi 0, %s39
      %s43 = sphi 0, %s42
      %s59 = sphi 0, %s43
      %s63 = sphi 0, %s63
      %s65 = sphi 0, %s63
      %s66 = sphi 0, %s65
      %s80 = sphi 0, %s66
      %s88 = sphi 0, %s90
      %s91 = sphi 0, %s88
      %s92 = sphi 0, %s91
      %s108 = sphi 0, %s92
      %s114 = sphi 0, %s116
      %s117 = sphi 0, %s114
      %s118 = sphi 0, %s117
      %s134 = sphi 0, %s118
      %s140 = sphi 0, %s142
      %s143 = sphi 0, %s140
      %s144 = sphi 0, %s143
      %s160 = sphi 0, %s144
    $region4: #{tpu_custom_call.1} parent=1 // loop_header_branch
      %20 = sbr.rel (%p18) target = $region8
    $region5: #{tpu_custom_call.1} parent=1 // loop_body
      %s22 = ssub.s32 %s17, 1
      %s23 = ssub.s32 %s17, 2
      %s30 = sadd.s32 1, %s25
      %p31 = scmp.ge.s32.totalorder %s30, 1
      %s32 = scalar_select %p31, 0, %s30
      %s33 = sadd.s32 1, %s24
      %s34 = scalar_select %p31, %s33, %s24
      %p35 = scmp.ge.s32.totalorder %s34, 2
      %s36 = scalar_select %p35, 0, %s34
      %s37 = ssub.s32 %s24, %s36
      %p38 = scmp.eq.s32.totalorder %s37, 0
      %s40 = sadd.s32 %s39, 1
      %s41 = scalar_select %p38, %s39, %s40
      %p44 = pneg %p38
      %p45 = scmp.eq.s32.totalorder %s17, 1
      %p46 = por %p44, %p45
      %p47 = scmp.ne.s32.totalorder %s39, %s42
      %p48 = scmp.eq.s32.totalorder %s17, 0
      %p49 = por %p47, %p48
      %p50 = scmp.ne.s32.totalorder %s39, %s42
      %p51 = scmp.eq.s32.totalorder %s22, 1
      %p52 = por %p50, %p51
      %p53 = scmp.ne.s32.totalorder %s42, %s43
      %p54 = scmp.eq.s32.totalorder %s22, 0
      %p55 = por %p53, %p54
      %p56 = scmp.ne.s32.totalorder %s42, %s43
      %p57 = scmp.eq.s32.totalorder %s23, 1
      %p58 = por %p56, %p57
      %p60 = scmp.ne.s32.totalorder %s43, %s59
      %p61 = scmp.eq.s32.totalorder %s23, 0
      %p62 = por %p60, %p61
      %s64 = sadd.s32 %s63, 1
      %p67 = scmp.eq.s32.totalorder %s17, 1
      %p68 = scmp.ne.s32.totalorder %s63, %s65
      %p69 = scmp.eq.s32.totalorder %s17, 0
      %p70 = por %p68, %p69
      %p71 = scmp.ne.s32.totalorder %s63, %s65
      %p72 = scmp.eq.s32.totalorder %s22, 1
      %p73 = por %p71, %p72
      %p74 = scmp.ne.s32.totalorder %s65, %s66
      %p75 = scmp.eq.s32.totalorder %s22, 0
      %p76 = por %p74, %p75
      %p77 = scmp.ne.s32.totalorder %s65, %s66
      %p78 = scmp.eq.s32.totalorder %s23, 1
      %p79 = por %p77, %p78
      %p81 = scmp.ne.s32.totalorder %s66, %s80
      %p82 = scmp.eq.s32.totalorder %s23, 0
      %p83 = por %p81, %p82
      %s84 = ssub.s32 %s24, %s36
      %s85 = ssub.s32 %s25, %s32
      %s86 = sor.u32 %s84, %s85
      %p87 = scmp.eq.s32.totalorder %s86, 0
      %s89 = sadd.s32 %s88, 1
      %s90 = scalar_select %p87, %s88, %s89
      %p93 = pneg %p87
      %p94 = scmp.eq.s32.totalorder %s17, 1
      %p95 = por %p93, %p94
      %p96 = scmp.ne.s32.totalorder %s88, %s91
      %p97 = scmp.eq.s32.totalorder %s17, 0
      %p98 = por %p96, %p97
      %p99 = scmp.ne.s32.totalorder %s88, %s91
      %p100 = scmp.eq.s32.totalorder %s22, 1
      %p101 = por %p99, %p100
      %p102 = scmp.ne.s32.totalorder %s91, %s92
      %p103 = scmp.eq.s32.totalorder %s22, 0
      %p104 = por %p102, %p103
      %p105 = scmp.ne.s32.totalorder %s91, %s92
      %p106 = scmp.eq.s32.totalorder %s23, 1
      %p107 = por %p105, %p106
      %p109 = scmp.ne.s32.totalorder %s92, %s108
      %p110 = scmp.eq.s32.totalorder %s23, 0
      %p111 = por %p109, %p110
      %s112 = ssub.s32 %s24, %s36
      %p113 = scmp.eq.s32.totalorder %s112, 0
      %s115 = sadd.s32 %s114, 1
      %s116 = scalar_select %p113, %s114, %s115
      %p119 = pneg %p113
      %p120 = scmp.eq.s32.totalorder %s17, 1
      %p121 = por %p119, %p120
      %p122 = scmp.ne.s32.totalorder %s114, %s117
      %p123 = scmp.eq.s32.totalorder %s17, 0
      %p124 = por %p122, %p123
      %p125 = scmp.ne.s32.totalorder %s114, %s117
      %p126 = scmp.eq.s32.totalorder %s22, 1
      %p127 = por %p125, %p126
      %p128 = scmp.ne.s32.totalorder %s117, %s118
      %p129 = scmp.eq.s32.totalorder %s22, 0
      %p130 = por %p128, %p129
      %p131 = scmp.ne.s32.totalorder %s117, %s118
      %p132 = scmp.eq.s32.totalorder %s23, 1
      %p133 = por %p131, %p132
      %p135 = scmp.ne.s32.totalorder %s118, %s134
      %p136 = scmp.eq.s32.totalorder %s23, 0
      %p137 = por %p135, %p136
      %s138 = ssub.s32 %s24, %s36
      %p139 = scmp.eq.s32.totalorder %s138, 0
      %s141 = sadd.s32 %s140, 1
      %s142 = scalar_select %p139, %s140, %s141
      %p145 = pneg %p139
      %p146 = scmp.eq.s32.totalorder %s17, 1
      %p147 = por %p145, %p146
      %p148 = scmp.ne.s32.totalorder %s140, %s143
      %p149 = scmp.eq.s32.totalorder %s17, 0
      %p150 = por %p148, %p149
      %p151 = scmp.ne.s32.totalorder %s140, %s143
      %p152 = scmp.eq.s32.totalorder %s22, 1
      %p153 = por %p151, %p152
      %p154 = scmp.ne.s32.totalorder %s143, %s144
      %p155 = scmp.eq.s32.totalorder %s22, 0
      %p156 = por %p154, %p155
      %p157 = scmp.ne.s32.totalorder %s143, %s144
      %p158 = scmp.eq.s32.totalorder %s23, 1
      %p159 = por %p157, %p158
      %p161 = scmp.ne.s32.totalorder %s144, %s160
      %p162 = scmp.eq.s32.totalorder %s23, 0
      %p163 = por %p161, %p162
      %p164 = scmp.le.s32.totalorder 1, %s17
      %p165 = scmp.lt.s32.totalorder %s17, 3
      %p166 = pnand %p164, %p165
      %p167 = pneg %p166
      // Predicated region
      $region9: #{tpu_custom_call.1} parent=5 // pred_check
        _
      $region10: #{tpu_custom_call.1} parent=5 // pred_check_branch
        %169 = sbr.rel (%p166) target = $region12
      $region11: #{tpu_custom_call.1} parent=5 // pred_region
        %s170 = ssub.s32 %s17, 1
        // Predicated region
        $region13: #{tpu_custom_call.1} parent=11 // pred_check
          %p171 = pneg %p76
        $region14: #{tpu_custom_call.1} parent=11 // pred_check_branch
          %173 = sbr.rel (%p171) target = $region16
        $region15: #{tpu_custom_call.1} parent=11 // pred_region
          _
        $region16: #{tpu_custom_call.1} parent=11 // pred_fallthru
          _
      $region12: #{tpu_custom_call.1} parent=5 // pred_fallthru
        _
      %p174 = scmp.lt.s32.totalorder %s17, 2
      // Predicated region
      $region17: #{tpu_custom_call.1} parent=5 // pred_check
        %p175 = pneg %p174
      $region18: #{tpu_custom_call.1} parent=5 // pred_check_branch
        %177 = sbr.rel (%p175) target = $region20
      $region19: #{tpu_custom_call.1} parent=5 // pred_region
        // Predicated region
        $region21: #{tpu_custom_call.1} parent=19 // pred_check
          %p178 = pneg %p49
        $region22: #{tpu_custom_call.1} parent=19 // pred_check_branch
          %180 = sbr.rel (%p178) target = $region24
        $region23: #{tpu_custom_call.1} parent=19 // pred_region
          %p181 = scmp.lt.s32.totalorder %s24, 1
          %s182 = scalar_select %p181, %s24, 1
          %s183 = smul.addr %s182, 54
          %s184 = smul.addr %s183, 8
          %s185 = scalar_lea.vmem %s0, %s184
        $region24: #{tpu_custom_call.1} parent=19 // pred_fallthru
          _
      $region20: #{tpu_custom_call.1} parent=5 // pred_fallthru
        _
      %p186 = scmp.le.s32.totalorder 1, %s17
      %p187 = scmp.lt.s32.totalorder %s17, 3
      %p188 = pnand %p186, %p187
      %p189 = pneg %p188
      // Predicated region
      $region25: #{tpu_custom_call.1} parent=5 // pred_check
        _
      $region26: #{tpu_custom_call.1} parent=5 // pred_check_branch
        %191 = sbr.rel (%p188) target = $region28
      $region27: #{tpu_custom_call.1} parent=5 // pred_region
        %s192 = ssub.s32 %s17, 1
        %p193 = scmp.lt.s32.totalorder %s26, 1
        %s194 = scalar_select %p193, %s26, 1
        %s195 = smul.addr %s194, 54
        %s196 = smul.addr %s195, 8
        %s197 = scalar_lea.vmem %s0, %s196
        %p198 = pneg %p55
        %p199 = pneg %p52
        %p200 = pneg %p76
        %p201 = pneg %p73
        %p202 = pneg %p104
        %p203 = pneg %p101
        %s204 = sand.u32 %s91, 1
        %s205 = scalar_lea.sflag [#allocation4], %s204
        %s206 = sand.u32 %s91, 1
        %s207 = smul.addr %s206, 256
        %s208 = scalar_lea.vmem [#allocation3], %s207
        %p209 = pneg %p130
        %p210 = pneg %p127
        %s211 = sand.u32 %s22, 1
        %s212 = scalar_lea.sflag [#allocation6], %s211
        %s213 = sand.u32 %s117, 1
        %s214 = scalar_lea.vmem [#allocation5], %s213
        %p215 = pneg %p156
        %p216 = pneg %p153
        %s217 = sand.u32 %s22, 1
        %s218 = scalar_lea.sflag [#allocation6], %s217
        %s219 = sand.u32 %s143, 1
        %s220 = scalar_lea.vmem [#allocation7], %s219
        %p221 = scmp.lt.s32.totalorder %s26, 1
        %s222 = scalar_select %p221, %s26, 1
        %s223 = smul.addr %s222, 54
        %s224 = smul.addr %s223, 8
        %s225 = scalar_lea.vmem %s0, %s224
        %s226 = smul.u32 32, %s27
        %s227 = smul.u32 %s27, 16
        %s228 = smul.u32 %s227, 24
        %s229 = scalar_lea.vmem %s225, %s228
        %v230 = vld [vmem:[%s229] sm:$0xff]
        %v231 = vld [vmem:[%s229 + $0x8] sm:$0xff]
        %v232 = vld [vmem:[%s229 + $0x18] sm:$0xff]
        %v233 = vld [vmem:[%s229 + $0x20] sm:$0xff]
        %v234 = vld [vmem:[%s229 + $0x30] sm:$0xff]
        %v235 = vld [vmem:[%s229 + $0x38] sm:$0xff]
        %v236 = vld [vmem:[%s229 + $0x48] sm:$0xff]
        %v237 = vld [vmem:[%s229 + $0x50] sm:$0xff]
        %v238 = vld [vmem:[%s229 + $0x60] sm:$0xff]
        %v239 = vld [vmem:[%s229 + $0x68] sm:$0xff]
        %v240 = vld [vmem:[%s229 + $0x78] sm:$0xff]
        %v241 = vld [vmem:[%s229 + $0x80] sm:$0xff]
        %v242 = vld [vmem:[%s229 + $0x90] sm:$0xff]
        %v243 = vld [vmem:[%s229 + $0x98] sm:$0xff]
        %v244 = vld [vmem:[%s229 + $0xa8] sm:$0xff]
        %v245 = vld [vmem:[%s229 + $0xb0] sm:$0xff]
        %v246 = vld [vmem:[%s229 + $0xc0] sm:$0xff]
        %v247 = vld [vmem:[%s229 + $0xc8] sm:$0xff]
        %v248 = vld [vmem:[%s229 + $0xd8] sm:$0xff]
        %v249 = vld [vmem:[%s229 + $0xe0] sm:$0xff]
        %v250 = vld [vmem:[%s229 + $0xf0] sm:$0xff]
        %v251 = vld [vmem:[%s229 + $0xf8] sm:$0xff]
        %v252 = vld [vmem:[%s229 + $0x108] sm:$0xff]
        %v253 = vld [vmem:[%s229 + $0x110] sm:$0xff]
        %v254 = vld [vmem:[%s229 + $0x120] sm:$0xff]
        %v255 = vld [vmem:[%s229 + $0x128] sm:$0xff]
        %v256 = vld [vmem:[%s229 + $0x138] sm:$0xff]
        %v257 = vld [vmem:[%s229 + $0x140] sm:$0xff]
        %v258 = vld [vmem:[%s229 + $0x150] sm:$0xff]
        %v259 = vld [vmem:[%s229 + $0x158] sm:$0xff]
        %v260 = vld [vmem:[%s229 + $0x168] sm:$0xff]
        %v261 = vld [vmem:[%s229 + $0x170] sm:$0xff]
        %vm262 = vcmask 31744
        %263 = vst.msk [vmem:[#allocation2] sm:$0xff] %vm262, %v230
        %264 = vst.msk [vmem:[#allocation2 + $0x8] sm:$0xff] %vm262, %v231
        %265 = vst.msk [vmem:[#allocation2 + $0x10] sm:$0xff] %vm262, %v232
        %266 = vst.msk [vmem:[#allocation2 + $0x18] sm:$0xff] %vm262, %v233
        %267 = vst.msk [vmem:[#allocation2 + $0x20] sm:$0xff] %vm262, %v234
        %268 = vst.msk [vmem:[#allocation2 + $0x28] sm:$0xff] %vm262, %v235
        %269 = vst.msk [vmem:[#allocation2 + $0x30] sm:$0xff] %vm262, %v236
        %270 = vst.msk [vmem:[#allocation2 + $0x38] sm:$0xff] %vm262, %v237
        %271 = vst.msk [vmem:[#allocation2 + $0x40] sm:$0xff] %vm262, %v238
        %272 = vst.msk [vmem:[#allocation2 + $0x48] sm:$0xff] %vm262, %v239
        %273 = vst.msk [vmem:[#allocation2 + $0x50] sm:$0xff] %vm262, %v240
        %274 = vst.msk [vmem:[#allocation2 + $0x58] sm:$0xff] %vm262, %v241
        %275 = vst.msk [vmem:[#allocation2 + $0x60] sm:$0xff] %vm262, %v242
        %276 = vst.msk [vmem:[#allocation2 + $0x68] sm:$0xff] %vm262, %v243
        %277 = vst.msk [vmem:[#allocation2 + $0x70] sm:$0xff] %vm262, %v244
        %278 = vst.msk [vmem:[#allocation2 + $0x78] sm:$0xff] %vm262, %v245
        %279 = vst.msk [vmem:[#allocation2 + $0x80] sm:$0xff] %vm262, %v246
        %280 = vst.msk [vmem:[#allocation2 + $0x88] sm:$0xff] %vm262, %v247
        %281 = vst.msk [vmem:[#allocation2 + $0x90] sm:$0xff] %vm262, %v248
        %282 = vst.msk [vmem:[#allocation2 + $0x98] sm:$0xff] %vm262, %v249
        %283 = vst.msk [vmem:[#allocation2 + $0xa0] sm:$0xff] %vm262, %v250
        %284 = vst.msk [vmem:[#allocation2 + $0xa8] sm:$0xff] %vm262, %v251
        %285 = vst.msk [vmem:[#allocation2 + $0xb0] sm:$0xff] %vm262, %v252
        %286 = vst.msk [vmem:[#allocation2 + $0xb8] sm:$0xff] %vm262, %v253
        %287 = vst.msk [vmem:[#allocation2 + $0xc0] sm:$0xff] %vm262, %v254
        %288 = vst.msk [vmem:[#allocation2 + $0xc8] sm:$0xff] %vm262, %v255
        %289 = vst.msk [vmem:[#allocation2 + $0xd0] sm:$0xff] %vm262, %v256
        %290 = vst.msk [vmem:[#allocation2 + $0xd8] sm:$0xff] %vm262, %v257
        %291 = vst.msk [vmem:[#allocation2 + $0xe0] sm:$0xff] %vm262, %v258
        %292 = vst.msk [vmem:[#allocation2 + $0xe8] sm:$0xff] %vm262, %v259
        %293 = vst.msk [vmem:[#allocation2 + $0xf0] sm:$0xff] %vm262, %v260
        %294 = vst.msk [vmem:[#allocation2 + $0xf8] sm:$0xff] %vm262, %v261
        %v295 = vld [vmem:[%s229 + $0x1] sm:$0xff]
        %v296 = vld [vmem:[%s229 + $0x9] sm:$0xff]
        %v297 = vld [vmem:[%s229 + $0x19] sm:$0xff]
        %v298 = vld [vmem:[%s229 + $0x21] sm:$0xff]
        %v299 = vld [vmem:[%s229 + $0x31] sm:$0xff]
        %v300 = vld [vmem:[%s229 + $0x39] sm:$0xff]
        %v301 = vld [vmem:[%s229 + $0x49] sm:$0xff]
        %v302 = vld [vmem:[%s229 + $0x51] sm:$0xff]
        %v303 = vld [vmem:[%s229 + $0x61] sm:$0xff]
        %v304 = vld [vmem:[%s229 + $0x69] sm:$0xff]
        %v305 = vld [vmem:[%s229 + $0x79] sm:$0xff]
        %v306 = vld [vmem:[%s229 + $0x81] sm:$0xff]
        %v307 = vld [vmem:[%s229 + $0x91] sm:$0xff]
        %v308 = vld [vmem:[%s229 + $0x99] sm:$0xff]
        %v309 = vld [vmem:[%s229 + $0xa9] sm:$0xff]
        %v310 = vld [vmem:[%s229 + $0xb1] sm:$0xff]
        %v311 = vld [vmem:[%s229 + $0xc1] sm:$0xff]
        %v312 = vld [vmem:[%s229 + $0xc9] sm:$0xff]
        %v313 = vld [vmem:[%s229 + $0xd9] sm:$0xff]
        %v314 = vld [vmem:[%s229 + $0xe1] sm:$0xff]
        %v315 = vld [vmem:[%s229 + $0xf1] sm:$0xff]
        %v316 = vld [vmem:[%s229 + $0xf9] sm:$0xff]
        %v317 = vld [vmem:[%s229 + $0x109] sm:$0xff]
        %v318 = vld [vmem:[%s229 + $0x111] sm:$0xff]
        %v319 = vld [vmem:[%s229 + $0x121] sm:$0xff]
        %v320 = vld [vmem:[%s229 + $0x129] sm:$0xff]
        %v321 = vld [vmem:[%s229 + $0x139] sm:$0xff]
        %v322 = vld [vmem:[%s229 + $0x141] sm:$0xff]
        %v323 = vld [vmem:[%s229 + $0x151] sm:$0xff]
        %v324 = vld [vmem:[%s229 + $0x159] sm:$0xff]
        %v325 = vld [vmem:[%s229 + $0x169] sm:$0xff]
        %v326 = vld [vmem:[%s229 + $0x171] sm:$0xff]
        %359 = vrot.lane.b32.xlu0 %v295, 4
        %v360 = vpop.permute.xlu0 %359
        %361 = vrot.lane.b32.xlu0 %v296, 4
        %v362 = vpop.permute.xlu0 %361
        %363 = vrot.lane.b32.xlu0 %v297, 4
        %v364 = vpop.permute.xlu0 %363
        %365 = vrot.lane.b32.xlu0 %v298, 4
        %v366 = vpop.permute.xlu0 %365
        %367 = vrot.lane.b32.xlu0 %v299, 4
        %v368 = vpop.permute.xlu0 %367
        %369 = vrot.lane.b32.xlu0 %v300, 4
        %v370 = vpop.permute.xlu0 %369
        %371 = vrot.lane.b32.xlu0 %v301, 4
        %v372 = vpop.permute.xlu0 %371
        %373 = vrot.lane.b32.xlu0 %v302, 4
        %v374 = vpop.permute.xlu0 %373
        %375 = vrot.lane.b32.xlu0 %v303, 4
        %v376 = vpop.permute.xlu0 %375
        %377 = vrot.lane.b32.xlu0 %v304, 4
        %v378 = vpop.permute.xlu0 %377
        %379 = vrot.lane.b32.xlu0 %v305, 4
        %v380 = vpop.permute.xlu0 %379
        %381 = vrot.lane.b32.xlu0 %v306, 4
        %v382 = vpop.permute.xlu0 %381
        %383 = vrot.lane.b32.xlu0 %v307, 4
        %v384 = vpop.permute.xlu0 %383
        %385 = vrot.lane.b32.xlu0 %v308, 4
        %v386 = vpop.permute.xlu0 %385
        %387 = vrot.lane.b32.xlu0 %v309, 4
        %v388 = vpop.permute.xlu0 %387
        %389 = vrot.lane.b32.xlu0 %v310, 4
        %v390 = vpop.permute.xlu0 %389
        %391 = vrot.lane.b32.xlu0 %v311, 4
        %v392 = vpop.permute.xlu0 %391
        %393 = vrot.lane.b32.xlu0 %v312, 4
        %v394 = vpop.permute.xlu0 %393
        %395 = vrot.lane.b32.xlu0 %v313, 4
        %v396 = vpop.permute.xlu0 %395
        %397 = vrot.lane.b32.xlu0 %v314, 4
        %v398 = vpop.permute.xlu0 %397
        %399 = vrot.lane.b32.xlu0 %v315, 4
        %v400 = vpop.permute.xlu0 %399
        %401 = vrot.lane.b32.xlu0 %v316, 4
        %v402 = vpop.permute.xlu0 %401
        %403 = vrot.lane.b32.xlu0 %v317, 4
        %v404 = vpop.permute.xlu0 %403
        %405 = vrot.lane.b32.xlu0 %v318, 4
        %v406 = vpop.permute.xlu0 %405
        %407 = vrot.lane.b32.xlu0 %v319, 4
        %v408 = vpop.permute.xlu0 %407
        %409 = vrot.lane.b32.xlu0 %v320, 4
        %v410 = vpop.permute.xlu0 %409
        %411 = vrot.lane.b32.xlu0 %v321, 4
        %v412 = vpop.permute.xlu0 %411
        %413 = vrot.lane.b32.xlu0 %v322, 4
        %v414 = vpop.permute.xlu0 %413
        %415 = vrot.lane.b32.xlu0 %v323, 4
        %v416 = vpop.permute.xlu0 %415
        %417 = vrot.lane.b32.xlu0 %v324, 4
        %v418 = vpop.permute.xlu0 %417
        %419 = vrot.lane.b32.xlu0 %v325, 4
        %v420 = vpop.permute.xlu0 %419
        %421 = vrot.lane.b32.xlu0 %v326, 4
        %v422 = vpop.permute.xlu0 %421
        %vm455 = vcmask 64544
        %456 = vst.msk [vmem:[#allocation2] sm:$0xff] %vm455, %v360
        %457 = vst.msk [vmem:[#allocation2 + $0x8] sm:$0xff] %vm455, %v362
        %458 = vst.msk [vmem:[#allocation2 + $0x10] sm:$0xff] %vm455, %v364
        %459 = vst.msk [vmem:[#allocation2 + $0x18] sm:$0xff] %vm455, %v366
        %460 = vst.msk [vmem:[#allocation2 + $0x20] sm:$0xff] %vm455, %v368
        %461 = vst.msk [vmem:[#allocation2 + $0x28] sm:$0xff] %vm455, %v370
        %462 = vst.msk [vmem:[#allocation2 + $0x30] sm:$0xff] %vm455, %v372
        %463 = vst.msk [vmem:[#allocation2 + $0x38] sm:$0xff] %vm455, %v374
        %464 = vst.msk [vmem:[#allocation2 + $0x40] sm:$0xff] %vm455, %v376
        %465 = vst.msk [vmem:[#allocation2 + $0x48] sm:$0xff] %vm455, %v378
        %466 = vst.msk [vmem:[#allocation2 + $0x50] sm:$0xff] %vm455, %v380
        %467 = vst.msk [vmem:[#allocation2 + $0x58] sm:$0xff] %vm455, %v382
        %468 = vst.msk [vmem:[#allocation2 + $0x60] sm:$0xff] %vm455, %v384
        %469 = vst.msk [vmem:[#allocation2 + $0x68] sm:$0xff] %vm455, %v386
        %470 = vst.msk [vmem:[#allocation2 + $0x70] sm:$0xff] %vm455, %v388
        %471 = vst.msk [vmem:[#allocation2 + $0x78] sm:$0xff] %vm455, %v390
        %472 = vst.msk [vmem:[#allocation2 + $0x80] sm:$0xff] %vm455, %v392
        %473 = vst.msk [vmem:[#allocation2 + $0x88] sm:$0xff] %vm455, %v394
        %474 = vst.msk [vmem:[#allocation2 + $0x90] sm:$0xff] %vm455, %v396
        %475 = vst.msk [vmem:[#allocation2 + $0x98] sm:$0xff] %vm455, %v398
        %476 = vst.msk [vmem:[#allocation2 + $0xa0] sm:$0xff] %vm455, %v400
        %477 = vst.msk [vmem:[#allocation2 + $0xa8] sm:$0xff] %vm455, %v402
        %478 = vst.msk [vmem:[#allocation2 + $0xb0] sm:$0xff] %vm455, %v404
        %479 = vst.msk [vmem:[#allocation2 + $0xb8] sm:$0xff] %vm455, %v406
        %480 = vst.msk [vmem:[#allocation2 + $0xc0] sm:$0xff] %vm455, %v408
        %481 = vst.msk [vmem:[#allocation2 + $0xc8] sm:$0xff] %vm455, %v410
        %482 = vst.msk [vmem:[#allocation2 + $0xd0] sm:$0xff] %vm455, %v412
        %483 = vst.msk [vmem:[#allocation2 + $0xd8] sm:$0xff] %vm455, %v414
        %484 = vst.msk [vmem:[#allocation2 + $0xe0] sm:$0xff] %vm455, %v416
        %485 = vst.msk [vmem:[#allocation2 + $0xe8] sm:$0xff] %vm455, %v418
        %486 = vst.msk [vmem:[#allocation2 + $0xf0] sm:$0xff] %vm455, %v420
        %487 = vst.msk [vmem:[#allocation2 + $0xf8] sm:$0xff] %vm455, %v422
        %v488 = vld [vmem:[%s229 + $0x2] sm:$0xff]
        %v489 = vld [vmem:[%s229 + $0xa] sm:$0xff]
        %v490 = vld [vmem:[%s229 + $0x1a] sm:$0xff]
        %v491 = vld [vmem:[%s229 + $0x22] sm:$0xff]
        %v492 = vld [vmem:[%s229 + $0x32] sm:$0xff]
        %v493 = vld [vmem:[%s229 + $0x3a] sm:$0xff]
        %v494 = vld [vmem:[%s229 + $0x4a] sm:$0xff]
        %v495 = vld [vmem:[%s229 + $0x52] sm:$0xff]
        %v496 = vld [vmem:[%s229 + $0x62] sm:$0xff]
        %v497 = vld [vmem:[%s229 + $0x6a] sm:$0xff]
        %v498 = vld [vmem:[%s229 + $0x7a] sm:$0xff]
        %v499 = vld [vmem:[%s229 + $0x82] sm:$0xff]
        %v500 = vld [vmem:[%s229 + $0x92] sm:$0xff]
        %v501 = vld [vmem:[%s229 + $0x9a] sm:$0xff]
        %v502 = vld [vmem:[%s229 + $0xaa] sm:$0xff]
        %v503 = vld [vmem:[%s229 + $0xb2] sm:$0xff]
        %v504 = vld [vmem:[%s229 + $0xc2] sm:$0xff]
        %v505 = vld [vmem:[%s229 + $0xca] sm:$0xff]
        %v506 = vld [vmem:[%s229 + $0xda] sm:$0xff]
        %v507 = vld [vmem:[%s229 + $0xe2] sm:$0xff]
        %v508 = vld [vmem:[%s229 + $0xf2] sm:$0xff]
        %v509 = vld [vmem:[%s229 + $0xfa] sm:$0xff]
        %v510 = vld [vmem:[%s229 + $0x10a] sm:$0xff]
        %v511 = vld [vmem:[%s229 + $0x112] sm:$0xff]
        %v512 = vld [vmem:[%s229 + $0x122] sm:$0xff]
        %v513 = vld [vmem:[%s229 + $0x12a] sm:$0xff]
        %v514 = vld [vmem:[%s229 + $0x13a] sm:$0xff]
        %v515 = vld [vmem:[%s229 + $0x142] sm:$0xff]
        %v516 = vld [vmem:[%s229 + $0x152] sm:$0xff]
        %v517 = vld [vmem:[%s229 + $0x15a] sm:$0xff]
        %v518 = vld [vmem:[%s229 + $0x16a] sm:$0xff]
        %v519 = vld [vmem:[%s229 + $0x172] sm:$0xff]
        %552 = vrot.lane.b32.xlu0 %v488, 8
        %v553 = vpop.permute.xlu0 %552
        %554 = vrot.lane.b32.xlu0 %v489, 8
        %v555 = vpop.permute.xlu0 %554
        %556 = vrot.lane.b32.xlu0 %v490, 8
        %v557 = vpop.permute.xlu0 %556
        %558 = vrot.lane.b32.xlu0 %v491, 8
        %v559 = vpop.permute.xlu0 %558
        %560 = vrot.lane.b32.xlu0 %v492, 8
        %v561 = vpop.permute.xlu0 %560
        %562 = vrot.lane.b32.xlu0 %v493, 8
        %v563 = vpop.permute.xlu0 %562
        %564 = vrot.lane.b32.xlu0 %v494, 8
        %v565 = vpop.permute.xlu0 %564
        %566 = vrot.lane.b32.xlu0 %v495, 8
        %v567 = vpop.permute.xlu0 %566
        %568 = vrot.lane.b32.xlu0 %v496, 8
        %v569 = vpop.permute.xlu0 %568
        %570 = vrot.lane.b32.xlu0 %v497, 8
        %v571 = vpop.permute.xlu0 %570
        %572 = vrot.lane.b32.xlu0 %v498, 8
        %v573 = vpop.permute.xlu0 %572
        %574 = vrot.lane.b32.xlu0 %v499, 8
        %v575 = vpop.permute.xlu0 %574
        %576 = vrot.lane.b32.xlu0 %v500, 8
        %v577 = vpop.permute.xlu0 %576
        %578 = vrot.lane.b32.xlu0 %v501, 8
        %v579 = vpop.permute.xlu0 %578
        %580 = vrot.lane.b32.xlu0 %v502, 8
        %v581 = vpop.permute.xlu0 %580
        %582 = vrot.lane.b32.xlu0 %v503, 8
        %v583 = vpop.permute.xlu0 %582
        %584 = vrot.lane.b32.xlu0 %v504, 8
        %v585 = vpop.permute.xlu0 %584
        %586 = vrot.lane.b32.xlu0 %v505, 8
        %v587 = vpop.permute.xlu0 %586
        %588 = vrot.lane.b32.xlu0 %v506, 8
        %v589 = vpop.permute.xlu0 %588
        %590 = vrot.lane.b32.xlu0 %v507, 8
        %v591 = vpop.permute.xlu0 %590
        %592 = vrot.lane.b32.xlu0 %v508, 8
        %v593 = vpop.permute.xlu0 %592
        %594 = vrot.lane.b32.xlu0 %v509, 8
        %v595 = vpop.permute.xlu0 %594
        %596 = vrot.lane.b32.xlu0 %v510, 8
        %v597 = vpop.permute.xlu0 %596
        %598 = vrot.lane.b32.xlu0 %v511, 8
        %v599 = vpop.permute.xlu0 %598
        %600 = vrot.lane.b32.xlu0 %v512, 8
        %v601 = vpop.permute.xlu0 %600
        %602 = vrot.lane.b32.xlu0 %v513, 8
        %v603 = vpop.permute.xlu0 %602
        %604 = vrot.lane.b32.xlu0 %v514, 8
        %v605 = vpop.permute.xlu0 %604
        %606 = vrot.lane.b32.xlu0 %v515, 8
        %v607 = vpop.permute.xlu0 %606
        %608 = vrot.lane.b32.xlu0 %v516, 8
        %v609 = vpop.permute.xlu0 %608
        %610 = vrot.lane.b32.xlu0 %v517, 8
        %v611 = vpop.permute.xlu0 %610
        %612 = vrot.lane.b32.xlu0 %v518, 8
        %v613 = vpop.permute.xlu0 %612
        %614 = vrot.lane.b32.xlu0 %v519, 8
        %v615 = vpop.permute.xlu0 %614
        %vm648 = vcmask 97344
        %649 = vst.msk [vmem:[#allocation2] sm:$0xff] %vm648, %v553
        %650 = vst.msk [vmem:[#allocation2 + $0x8] sm:$0xff] %vm648, %v555
        %651 = vst.msk [vmem:[#allocation2 + $0x10] sm:$0xff] %vm648, %v557
        %652 = vst.msk [vmem:[#allocation2 + $0x18] sm:$0xff] %vm648, %v559
        %653 = vst.msk [vmem:[#allocation2 + $0x20] sm:$0xff] %vm648, %v561
        %654 = vst.msk [vmem:[#allocation2 + $0x28] sm:$0xff] %vm648, %v563
        %655 = vst.msk [vmem:[#allocation2 + $0x30] sm:$0xff] %vm648, %v565
        %656 = vst.msk [vmem:[#allocation2 + $0x38] sm:$0xff] %vm648, %v567
        %657 = vst.msk [vmem:[#allocation2 + $0x40] sm:$0xff] %vm648, %v569
        %658 = vst.msk [vmem:[#allocation2 + $0x48] sm:$0xff] %vm648, %v571
        %659 = vst.msk [vmem:[#allocation2 + $0x50] sm:$0xff] %vm648, %v573
        %660 = vst.msk [vmem:[#allocation2 + $0x58] sm:$0xff] %vm648, %v575
        %661 = vst.msk [vmem:[#allocation2 + $0x60] sm:$0xff] %vm648, %v577
        %662 = vst.msk [vmem:[#allocation2 + $0x68] sm:$0xff] %vm648, %v579
        %663 = vst.msk [vmem:[#allocation2 + $0x70] sm:$0xff] %vm648, %v581
        %664 = vst.msk [vmem:[#allocation2 + $0x78] sm:$0xff] %vm648, %v583
        %665 = vst.msk [vmem:[#allocation2 + $0x80] sm:$0xff] %vm648, %v585
        %666 = vst.msk [vmem:[#allocation2 + $0x88] sm:$0xff] %vm648, %v587
        %667 = vst.msk [vmem:[#allocation2 + $0x90] sm:$0xff] %vm648, %v589
        %668 = vst.msk [vmem:[#allocation2 + $0x98] sm:$0xff] %vm648, %v591
        %669 = vst.msk [vmem:[#allocation2 + $0xa0] sm:$0xff] %vm648, %v593
        %670 = vst.msk [vmem:[#allocation2 + $0xa8] sm:$0xff] %vm648, %v595
        %671 = vst.msk [vmem:[#allocation2 + $0xb0] sm:$0xff] %vm648, %v597
        %672 = vst.msk [vmem:[#allocation2 + $0xb8] sm:$0xff] %vm648, %v599
        %673 = vst.msk [vmem:[#allocation2 + $0xc0] sm:$0xff] %vm648, %v601
        %674 = vst.msk [vmem:[#allocation2 + $0xc8] sm:$0xff] %vm648, %v603
        %675 = vst.msk [vmem:[#allocation2 + $0xd0] sm:$0xff] %vm648, %v605
        %676 = vst.msk [vmem:[#allocation2 + $0xd8] sm:$0xff] %vm648, %v607
        %677 = vst.msk [vmem:[#allocation2 + $0xe0] sm:$0xff] %vm648, %v609
        %678 = vst.msk [vmem:[#allocation2 + $0xe8] sm:$0xff] %vm648, %v611
        %679 = vst.msk [vmem:[#allocation2 + $0xf0] sm:$0xff] %vm648, %v613
        %680 = vst.msk [vmem:[#allocation2 + $0xf8] sm:$0xff] %vm648, %v615
        %s681 = sadd.s32 %s227, 1
        %s682 = smul.u32 %s681, 24
        %s683 = scalar_lea.vmem %s225, %s682
        %v684 = vld [vmem:[%s683] sm:$0xff]
        %v685 = vld [vmem:[%s683 + $0x8] sm:$0xff]
        %v686 = vld [vmem:[%s683 + $0x18] sm:$0xff]
        %v687 = vld [vmem:[%s683 + $0x20] sm:$0xff]
        %v688 = vld [vmem:[%s683 + $0x30] sm:$0xff]
        %v689 = vld [vmem:[%s683 + $0x38] sm:$0xff]
        %v690 = vld [vmem:[%s683 + $0x48] sm:$0xff]
        %v691 = vld [vmem:[%s683 + $0x50] sm:$0xff]
        %v692 = vld [vmem:[%s683 + $0x60] sm:$0xff]
        %v693 = vld [vmem:[%s683 + $0x68] sm:$0xff]
        %v694 = vld [vmem:[%s683 + $0x78] sm:$0xff]
        %v695 = vld [vmem:[%s683 + $0x80] sm:$0xff]
        %v696 = vld [vmem:[%s683 + $0x90] sm:$0xff]
        %v697 = vld [vmem:[%s683 + $0x98] sm:$0xff]
        %v698 = vld [vmem:[%s683 + $0xa8] sm:$0xff]
        %v699 = vld [vmem:[%s683 + $0xb0] sm:$0xff]
        %v700 = vld [vmem:[%s683 + $0xc0] sm:$0xff]
        %v701 = vld [vmem:[%s683 + $0xc8] sm:$0xff]
        %v702 = vld [vmem:[%s683 + $0xd8] sm:$0xff]
        %v703 = vld [vmem:[%s683 + $0xe0] sm:$0xff]
        %v704 = vld [vmem:[%s683 + $0xf0] sm:$0xff]
        %v705 = vld [vmem:[%s683 + $0xf8] sm:$0xff]
        %v706 = vld [vmem:[%s683 + $0x108] sm:$0xff]
        %v707 = vld [vmem:[%s683 + $0x110] sm:$0xff]
        %v708 = vld [vmem:[%s683 + $0x120] sm:$0xff]
        %v709 = vld [vmem:[%s683 + $0x128] sm:$0xff]
        %v710 = vld [vmem:[%s683 + $0x138] sm:$0xff]
        %v711 = vld [vmem:[%s683 + $0x140] sm:$0xff]
        %v712 = vld [vmem:[%s683 + $0x150] sm:$0xff]
        %v713 = vld [vmem:[%s683 + $0x158] sm:$0xff]
        %v714 = vld [vmem:[%s683 + $0x168] sm:$0xff]
        %v715 = vld [vmem:[%s683 + $0x170] sm:$0xff]
        %748 = vrot.lane.b32.xlu0 %v684, 12
        %v749 = vpop.permute.xlu0 %748
        %750 = vrot.lane.b32.xlu0 %v685, 12
        %v751 = vpop.permute.xlu0 %750
        %752 = vrot.lane.b32.xlu0 %v686, 12
        %v753 = vpop.permute.xlu0 %752
        %754 = vrot.lane.b32.xlu0 %v687, 12
        %v755 = vpop.permute.xlu0 %754
        %756 = vrot.lane.b32.xlu0 %v688, 12
        %v757 = vpop.permute.xlu0 %756
        %758 = vrot.lane.b32.xlu0 %v689, 12
        %v759 = vpop.permute.xlu0 %758
        %760 = vrot.lane.b32.xlu0 %v690, 12
        %v761 = vpop.permute.xlu0 %760
        %762 = vrot.lane.b32.xlu0 %v691, 12
        %v763 = vpop.permute.xlu0 %762
        %764 = vrot.lane.b32.xlu0 %v692, 12
        %v765 = vpop.permute.xlu0 %764
        %766 = vrot.lane.b32.xlu0 %v693, 12
        %v767 = vpop.permute.xlu0 %766
        %768 = vrot.lane.b32.xlu0 %v694, 12
        %v769 = vpop.permute.xlu0 %768
        %770 = vrot.lane.b32.xlu0 %v695, 12
        %v771 = vpop.permute.xlu0 %770
        %772 = vrot.lane.b32.xlu0 %v696, 12
        %v773 = vpop.permute.xlu0 %772
        %774 = vrot.lane.b32.xlu0 %v697, 12
        %v775 = vpop.permute.xlu0 %774
        %776 = vrot.lane.b32.xlu0 %v698, 12
        %v777 = vpop.permute.xlu0 %776
        %778 = vrot.lane.b32.xlu0 %v699, 12
        %v779 = vpop.permute.xlu0 %778
        %780 = vrot.lane.b32.xlu0 %v700, 12
        %v781 = vpop.permute.xlu0 %780
        %782 = vrot.lane.b32.xlu0 %v701, 12
        %v783 = vpop.permute.xlu0 %782
        %784 = vrot.lane.b32.xlu0 %v702, 12
        %v785 = vpop.permute.xlu0 %784
        %786 = vrot.lane.b32.xlu0 %v703, 12
        %v787 = vpop.permute.xlu0 %786
        %788 = vrot.lane.b32.xlu0 %v704, 12
        %v789 = vpop.permute.xlu0 %788
        %790 = vrot.lane.b32.xlu0 %v705, 12
        %v791 = vpop.permute.xlu0 %790
        %792 = vrot.lane.b32.xlu0 %v706, 12
        %v793 = vpop.permute.xlu0 %792
        %794 = vrot.lane.b32.xlu0 %v707, 12
        %v795 = vpop.permute.xlu0 %794
        %796 = vrot.lane.b32.xlu0 %v708, 12
        %v797 = vpop.permute.xlu0 %796
        %798 = vrot.lane.b32.xlu0 %v709, 12
        %v799 = vpop.permute.xlu0 %798
        %800 = vrot.lane.b32.xlu0 %v710, 12
        %v801 = vpop.permute.xlu0 %800
        %802 = vrot.lane.b32.xlu0 %v711, 12
        %v803 = vpop.permute.xlu0 %802
        %804 = vrot.lane.b32.xlu0 %v712, 12
        %v805 = vpop.permute.xlu0 %804
        %806 = vrot.lane.b32.xlu0 %v713, 12
        %v807 = vpop.permute.xlu0 %806
        %808 = vrot.lane.b32.xlu0 %v714, 12
        %v809 = vpop.permute.xlu0 %808
        %810 = vrot.lane.b32.xlu0 %v715, 12
        %v811 = vpop.permute.xlu0 %810
        %vm844 = vcmask 130144
        %845 = vst.msk [vmem:[#allocation2] sm:$0xff] %vm844, %v749
        %846 = vst.msk [vmem:[#allocation2 + $0x8] sm:$0xff] %vm844, %v751
        %847 = vst.msk [vmem:[#allocation2 + $0x10] sm:$0xff] %vm844, %v753
        %848 = vst.msk [vmem:[#allocation2 + $0x18] sm:$0xff] %vm844, %v755
        %849 = vst.msk [vmem:[#allocation2 + $0x20] sm:$0xff] %vm844, %v757
        %850 = vst.msk [vmem:[#allocation2 + $0x28] sm:$0xff] %vm844, %v759
        %851 = vst.msk [vmem:[#allocation2 + $0x30] sm:$0xff] %vm844, %v761
        %852 = vst.msk [vmem:[#allocation2 + $0x38] sm:$0xff] %vm844, %v763
        %853 = vst.msk [vmem:[#allocation2 + $0x40] sm:$0xff] %vm844, %v765
        %854 = vst.msk [vmem:[#allocation2 + $0x48] sm:$0xff] %vm844, %v767
        %855 = vst.msk [vmem:[#allocation2 + $0x50] sm:$0xff] %vm844, %v769
        %856 = vst.msk [vmem:[#allocation2 + $0x58] sm:$0xff] %vm844, %v771
        %857 = vst.msk [vmem:[#allocation2 + $0x60] sm:$0xff] %vm844, %v773
        %858 = vst.msk [vmem:[#allocation2 + $0x68] sm:$0xff] %vm844, %v775
        %859 = vst.msk [vmem:[#allocation2 + $0x70] sm:$0xff] %vm844, %v777
        %860 = vst.msk [vmem:[#allocation2 + $0x78] sm:$0xff] %vm844, %v779
        %861 = vst.msk [vmem:[#allocation2 + $0x80] sm:$0xff] %vm844, %v781
        %862 = vst.msk [vmem:[#allocation2 + $0x88] sm:$0xff] %vm844, %v783
        %863 = vst.msk [vmem:[#allocation2 + $0x90] sm:$0xff] %vm844, %v785
        %864 = vst.msk [vmem:[#allocation2 + $0x98] sm:$0xff] %vm844, %v787
        %865 = vst.msk [vmem:[#allocation2 + $0xa0] sm:$0xff] %vm844, %v789
        %866 = vst.msk [vmem:[#allocation2 + $0xa8] sm:$0xff] %vm844, %v791
        %867 = vst.msk [vmem:[#allocation2 + $0xb0] sm:$0xff] %vm844, %v793
        %868 = vst.msk [vmem:[#allocation2 + $0xb8] sm:$0xff] %vm844, %v795
        %869 = vst.msk [vmem:[#allocation2 + $0xc0] sm:$0xff] %vm844, %v797
        %870 = vst.msk [vmem:[#allocation2 + $0xc8] sm:$0xff] %vm844, %v799
        %871 = vst.msk [vmem:[#allocation2 + $0xd0] sm:$0xff] %vm844, %v801
        %872 = vst.msk [vmem:[#allocation2 + $0xd8] sm:$0xff] %vm844, %v803
        %873 = vst.msk [vmem:[#allocation2 + $0xe0] sm:$0xff] %vm844, %v805
        %874 = vst.msk [vmem:[#allocation2 + $0xe8] sm:$0xff] %vm844, %v807
        %875 = vst.msk [vmem:[#allocation2 + $0xf0] sm:$0xff] %vm844, %v809
        %876 = vst.msk [vmem:[#allocation2 + $0xf8] sm:$0xff] %vm844, %v811
        %v877 = vld [vmem:[%s683 + $0x1] sm:$0xff]
        %v878 = vld [vmem:[%s683 + $0x9] sm:$0xff]
        %v879 = vld [vmem:[%s683 + $0x19] sm:$0xff]
        %v880 = vld [vmem:[%s683 + $0x21] sm:$0xff]
        %v881 = vld [vmem:[%s683 + $0x31] sm:$0xff]
        %v882 = vld [vmem:[%s683 + $0x39] sm:$0xff]
        %v883 = vld [vmem:[%s683 + $0x49] sm:$0xff]
        %v884 = vld [vmem:[%s683 + $0x51] sm:$0xff]
        %v885 = vld [vmem:[%s683 + $0x61] sm:$0xff]
        %v886 = vld [vmem:[%s683 + $0x69] sm:$0xff]
        %v887 = vld [vmem:[%s683 + $0x79] sm:$0xff]
        %v888 = vld [vmem:[%s683 + $0x81] sm:$0xff]
        %v889 = vld [vmem:[%s683 + $0x91] sm:$0xff]
        %v890 = vld [vmem:[%s683 + $0x99] sm:$0xff]
        %v891 = vld [vmem:[%s683 + $0xa9] sm:$0xff]
        %v892 = vld [vmem:[%s683 + $0xb1] sm:$0xff]
        %v893 = vld [vmem:[%s683 + $0xc1] sm:$0xff]
        %v894 = vld [vmem:[%s683 + $0xc9] sm:$0xff]
        %v895 = vld [vmem:[%s683 + $0xd9] sm:$0xff]
        %v896 = vld [vmem:[%s683 + $0xe1] sm:$0xff]
        %v897 = vld [vmem:[%s683 + $0xf1] sm:$0xff]
        %v898 = vld [vmem:[%s683 + $0xf9] sm:$0xff]
        %v899 = vld [vmem:[%s683 + $0x109] sm:$0xff]
        %v900 = vld [vmem:[%s683 + $0x111] sm:$0xff]
        %v901 = vld [vmem:[%s683 + $0x121] sm:$0xff]
        %v902 = vld [vmem:[%s683 + $0x129] sm:$0xff]
        %v903 = vld [vmem:[%s683 + $0x139] sm:$0xff]
        %v904 = vld [vmem:[%s683 + $0x141] sm:$0xff]
        %v905 = vld [vmem:[%s683 + $0x151] sm:$0xff]
        %v906 = vld [vmem:[%s683 + $0x159] sm:$0xff]
        %v907 = vld [vmem:[%s683 + $0x169] sm:$0xff]
        %v908 = vld [vmem:[%s683 + $0x171] sm:$0xff]
        %941 = vrot.lane.b32.xlu0 %v877, 16
        %v942 = vpop.permute.xlu0 %941
        %943 = vrot.lane.b32.xlu0 %v878, 16
        %v944 = vpop.permute.xlu0 %943
        %945 = vrot.lane.b32.xlu0 %v879, 16
        %v946 = vpop.permute.xlu0 %945
        %947 = vrot.lane.b32.xlu0 %v880, 16
        %v948 = vpop.permute.xlu0 %947
        %949 = vrot.lane.b32.xlu0 %v881, 16
        %v950 = vpop.permute.xlu0 %949
        %951 = vrot.lane.b32.xlu0 %v882, 16
        %v952 = vpop.permute.xlu0 %951
        %953 = vrot.lane.b32.xlu0 %v883, 16
        %v954 = vpop.permute.xlu0 %953
        %955 = vrot.lane.b32.xlu0 %v884, 16
        %v956 = vpop.permute.xlu0 %955
        %957 = vrot.lane.b32.xlu0 %v885, 16
        %v958 = vpop.permute.xlu0 %957
        %959 = vrot.lane.b32.xlu0 %v886, 16
        %v960 = vpop.permute.xlu0 %959
        %961 = vrot.lane.b32.xlu0 %v887, 16
        %v962 = vpop.permute.xlu0 %961
        %963 = vrot.lane.b32.xlu0 %v888, 16
        %v964 = vpop.permute.xlu0 %963
        %965 = vrot.lane.b32.xlu0 %v889, 16
        %v966 = vpop.permute.xlu0 %965
        %967 = vrot.lane.b32.xlu0 %v890, 16
        %v968 = vpop.permute.xlu0 %967
        %969 = vrot.lane.b32.xlu0 %v891, 16
        %v970 = vpop.permute.xlu0 %969
        %971 = vrot.lane.b32.xlu0 %v892, 16
        %v972 = vpop.permute.xlu0 %971
        %973 = vrot.lane.b32.xlu0 %v893, 16
        %v974 = vpop.permute.xlu0 %973
        %975 = vrot.lane.b32.xlu0 %v894, 16
        %v976 = vpop.permute.xlu0 %975
        %977 = vrot.lane.b32.xlu0 %v895, 16
        %v978 = vpop.permute.xlu0 %977
        %979 = vrot.lane.b32.xlu0 %v896, 16
        %v980 = vpop.permute.xlu0 %979
        %981 = vrot.lane.b32.xlu0 %v897, 16
        %v982 = vpop.permute.xlu0 %981
        %983 = vrot.lane.b32.xlu0 %v898, 16
        %v984 = vpop.permute.xlu0 %983
        %985 = vrot.lane.b32.xlu0 %v899, 16
        %v986 = vpop.permute.xlu0 %985
        %987 = vrot.lane.b32.xlu0 %v900, 16
        %v988 = vpop.permute.xlu0 %987
        %989 = vrot.lane.b32.xlu0 %v901, 16
        %v990 = vpop.permute.xlu0 %989
        %991 = vrot.lane.b32.xlu0 %v902, 16
        %v992 = vpop.permute.xlu0 %991
        %993 = vrot.lane.b32.xlu0 %v903, 16
        %v994 = vpop.permute.xlu0 %993
        %995 = vrot.lane.b32.xlu0 %v904, 16
        %v996 = vpop.permute.xlu0 %995
        %997 = vrot.lane.b32.xlu0 %v905, 16
        %v998 = vpop.permute.xlu0 %997
        %999 = vrot.lane.b32.xlu0 %v906, 16
        %v1000 = vpop.permute.xlu0 %999
        %1001 = vrot.lane.b32.xlu0 %v907, 16
        %v1002 = vpop.permute.xlu0 %1001
        %1003 = vrot.lane.b32.xlu0 %v908, 16
        %v1004 = vpop.permute.xlu0 %1003
        %vm1037 = vcmask 162944
        %1038 = vst.msk [vmem:[#allocation2] sm:$0xff] %vm1037, %v942
        %1039 = vst.msk [vmem:[#allocation2 + $0x8] sm:$0xff] %vm1037, %v944
        %1040 = vst.msk [vmem:[#allocation2 + $0x10] sm:$0xff] %vm1037, %v946
        %1041 = vst.msk [vmem:[#allocation2 + $0x18] sm:$0xff] %vm1037, %v948
        %1042 = vst.msk [vmem:[#allocation2 + $0x20] sm:$0xff] %vm1037, %v950
        %1043 = vst.msk [vmem:[#allocation2 + $0x28] sm:$0xff] %vm1037, %v952
        %1044 = vst.msk [vmem:[#allocation2 + $0x30] sm:$0xff] %vm1037, %v954
        %1045 = vst.msk [vmem:[#allocation2 + $0x38] sm:$0xff] %vm1037, %v956
        %1046 = vst.msk [vmem:[#allocation2 + $0x40] sm:$0xff] %vm1037, %v958
        %1047 = vst.msk [vmem:[#allocation2 + $0x48] sm:$0xff] %vm1037, %v960
        %1048 = vst.msk [vmem:[#allocation2 + $0x50] sm:$0xff] %vm1037, %v962
        %1049 = vst.msk [vmem:[#allocation2 + $0x58] sm:$0xff] %vm1037, %v964
        %1050 = vst.msk [vmem:[#allocation2 + $0x60] sm:$0xff] %vm1037, %v966
        %1051 = vst.msk [vmem:[#allocation2 + $0x68] sm:$0xff] %vm1037, %v968
        %1052 = vst.msk [vmem:[#allocation2 + $0x70] sm:$0xff] %vm1037, %v970
        %1053 = vst.msk [vmem:[#allocation2 + $0x78] sm:$0xff] %vm1037, %v972
        %1054 = vst.msk [vmem:[#allocation2 + $0x80] sm:$0xff] %vm1037, %v974
        %1055 = vst.msk [vmem:[#allocation2 + $0x88] sm:$0xff] %vm1037, %v976
        %1056 = vst.msk [vmem:[#allocation2 + $0x90] sm:$0xff] %vm1037, %v978
        %1057 = vst.msk [vmem:[#allocation2 + $0x98] sm:$0xff] %vm1037, %v980
        %1058 = vst.msk [vmem:[#allocation2 + $0xa0] sm:$0xff] %vm1037, %v982
        %1059 = vst.msk [vmem:[#allocation2 + $0xa8] sm:$0xff] %vm1037, %v984
        %1060 = vst.msk [vmem:[#allocation2 + $0xb0] sm:$0xff] %vm1037, %v986
        %1061 = vst.msk [vmem:[#allocation2 + $0xb8] sm:$0xff] %vm1037, %v988
        %1062 = vst.msk [vmem:[#allocation2 + $0xc0] sm:$0xff] %vm1037, %v990
        %1063 = vst.msk [vmem:[#allocation2 + $0xc8] sm:$0xff] %vm1037, %v992
        %1064 = vst.msk [vmem:[#allocation2 + $0xd0] sm:$0xff] %vm1037, %v994
        %1065 = vst.msk [vmem:[#allocation2 + $0xd8] sm:$0xff] %vm1037, %v996
        %1066 = vst.msk [vmem:[#allocation2 + $0xe0] sm:$0xff] %vm1037, %v998
        %1067 = vst.msk [vmem:[#allocation2 + $0xe8] sm:$0xff] %vm1037, %v1000
        %1068 = vst.msk [vmem:[#allocation2 + $0xf0] sm:$0xff] %vm1037, %v1002
        %1069 = vst.msk [vmem:[#allocation2 + $0xf8] sm:$0xff] %vm1037, %v1004
        %v1070 = vld [vmem:[%s683 + $0x2] sm:$0xff]
        %v1071 = vld [vmem:[%s683 + $0xa] sm:$0xff]
        %v1072 = vld [vmem:[%s683 + $0x1a] sm:$0xff]
        %v1073 = vld [vmem:[%s683 + $0x22] sm:$0xff]
        %v1074 = vld [vmem:[%s683 + $0x32] sm:$0xff]
        %v1075 = vld [vmem:[%s683 + $0x3a] sm:$0xff]
        %v1076 = vld [vmem:[%s683 + $0x4a] sm:$0xff]
        %v1077 = vld [vmem:[%s683 + $0x52] sm:$0xff]
        %v1078 = vld [vmem:[%s683 + $0x62] sm:$0xff]
        %v1079 = vld [vmem:[%s683 + $0x6a] sm:$0xff]
        %v1080 = vld [vmem:[%s683 + $0x7a] sm:$0xff]
        %v1081 = vld [vmem:[%s683 + $0x82] sm:$0xff]
        %v1082 = vld [vmem:[%s683 + $0x92] sm:$0xff]
        %v1083 = vld [vmem:[%s683 + $0x9a] sm:$0xff]
        %v1084 = vld [vmem:[%s683 + $0xaa] sm:$0xff]
        %v1085 = vld [vmem:[%s683 + $0xb2] sm:$0xff]
        %v1086 = vld [vmem:[%s683 + $0xc2] sm:$0xff]
        %v1087 = vld [vmem:[%s683 + $0xca] sm:$0xff]
        %v1088 = vld [vmem:[%s683 + $0xda] sm:$0xff]
        %v1089 = vld [vmem:[%s683 + $0xe2] sm:$0xff]
        %v1090 = vld [vmem:[%s683 + $0xf2] sm:$0xff]
        %v1091 = vld [vmem:[%s683 + $0xfa] sm:$0xff]
        %v1092 = vld [vmem:[%s683 + $0x10a] sm:$0xff]
        %v1093 = vld [vmem:[%s683 + $0x112] sm:$0xff]
        %v1094 = vld [vmem:[%s683 + $0x122] sm:$0xff]
        %v1095 = vld [vmem:[%s683 + $0x12a] sm:$0xff]
        %v1096 = vld [vmem:[%s683 + $0x13a] sm:$0xff]
        %v1097 = vld [vmem:[%s683 + $0x142] sm:$0xff]
        %v1098 = vld [vmem:[%s683 + $0x152] sm:$0xff]
        %v1099 = vld [vmem:[%s683 + $0x15a] sm:$0xff]
        %v1100 = vld [vmem:[%s683 + $0x16a] sm:$0xff]
        %v1101 = vld [vmem:[%s683 + $0x172] sm:$0xff]
        %1134 = vrot.lane.b32.xlu0 %v1070, 20
        %v1135 = vpop.permute.xlu0 %1134
        %1136 = vrot.lane.b32.xlu0 %v1071, 20
        %v1137 = vpop.permute.xlu0 %1136
        %1138 = vrot.lane.b32.xlu0 %v1072, 20
        %v1139 = vpop.permute.xlu0 %1138
        %1140 = vrot.lane.b32.xlu0 %v1073, 20
        %v1141 = vpop.permute.xlu0 %1140
        %1142 = vrot.lane.b32.xlu0 %v1074, 20
        %v1143 = vpop.permute.xlu0 %1142
        %1144 = vrot.lane.b32.xlu0 %v1075, 20
        %v1145 = vpop.permute.xlu0 %1144
        %1146 = vrot.lane.b32.xlu0 %v1076, 20
        %v1147 = vpop.permute.xlu0 %1146
        %1148 = vrot.lane.b32.xlu0 %v1077, 20
        %v1149 = vpop.permute.xlu0 %1148
        %1150 = vrot.lane.b32.xlu0 %v1078, 20
        %v1151 = vpop.permute.xlu0 %1150
        %1152 = vrot.lane.b32.xlu0 %v1079, 20
        %v1153 = vpop.permute.xlu0 %1152
        %1154 = vrot.lane.b32.xlu0 %v1080, 20
        %v1155 = vpop.permute.xlu0 %1154
        %1156 = vrot.lane.b32.xlu0 %v1081, 20
        %v1157 = vpop.permute.xlu0 %1156
        %1158 = vrot.lane.b32.xlu0 %v1082, 20
        %v1159 = vpop.permute.xlu0 %1158
        %1160 = vrot.lane.b32.xlu0 %v1083, 20
        %v1161 = vpop.permute.xlu0 %1160
        %1162 = vrot.lane.b32.xlu0 %v1084, 20
        %v1163 = vpop.permute.xlu0 %1162
        %1164 = vrot.lane.b32.xlu0 %v1085, 20
        %v1165 = vpop.permute.xlu0 %1164
        %1166 = vrot.lane.b32.xlu0 %v1086, 20
        %v1167 = vpop.permute.xlu0 %1166
        %1168 = vrot.lane.b32.xlu0 %v1087, 20
        %v1169 = vpop.permute.xlu0 %1168
        %1170 = vrot.lane.b32.xlu0 %v1088, 20
        %v1171 = vpop.permute.xlu0 %1170
        %1172 = vrot.lane.b32.xlu0 %v1089, 20
        %v1173 = vpop.permute.xlu0 %1172
        %1174 = vrot.lane.b32.xlu0 %v1090, 20
        %v1175 = vpop.permute.xlu0 %1174
        %1176 = vrot.lane.b32.xlu0 %v1091, 20
        %v1177 = vpop.permute.xlu0 %1176
        %1178 = vrot.lane.b32.xlu0 %v1092, 20
        %v1179 = vpop.permute.xlu0 %1178
        %1180 = vrot.lane.b32.xlu0 %v1093, 20
        %v1181 = vpop.permute.xlu0 %1180
        %1182 = vrot.lane.b32.xlu0 %v1094, 20
        %v1183 = vpop.permute.xlu0 %1182
        %1184 = vrot.lane.b32.xlu0 %v1095, 20
        %v1185 = vpop.permute.xlu0 %1184
        %1186 = vrot.lane.b32.xlu0 %v1096, 20
        %v1187 = vpop.permute.xlu0 %1186
        %1188 = vrot.lane.b32.xlu0 %v1097, 20
        %v1189 = vpop.permute.xlu0 %1188
        %1190 = vrot.lane.b32.xlu0 %v1098, 20
        %v1191 = vpop.permute.xlu0 %1190
        %1192 = vrot.lane.b32.xlu0 %v1099, 20
        %v1193 = vpop.permute.xlu0 %1192
        %1194 = vrot.lane.b32.xlu0 %v1100, 20
        %v1195 = vpop.permute.xlu0 %1194
        %1196 = vrot.lane.b32.xlu0 %v1101, 20
        %v1197 = vpop.permute.xlu0 %1196
        %vm1230 = vcmask 195744
        %1231 = vst.msk [vmem:[#allocation2] sm:$0xff] %vm1230, %v1135
        %1232 = vst.msk [vmem:[#allocation2 + $0x8] sm:$0xff] %vm1230, %v1137
        %1233 = vst.msk [vmem:[#allocation2 + $0x10] sm:$0xff] %vm1230, %v1139
        %1234 = vst.msk [vmem:[#allocation2 + $0x18] sm:$0xff] %vm1230, %v1141
        %1235 = vst.msk [vmem:[#allocation2 + $0x20] sm:$0xff] %vm1230, %v1143
        %1236 = vst.msk [vmem:[#allocation2 + $0x28] sm:$0xff] %vm1230, %v1145
        %1237 = vst.msk [vmem:[#allocation2 + $0x30] sm:$0xff] %vm1230, %v1147
        %1238 = vst.msk [vmem:[#allocation2 + $0x38] sm:$0xff] %vm1230, %v1149
        %1239 = vst.msk [vmem:[#allocation2 + $0x40] sm:$0xff] %vm1230, %v1151
        %1240 = vst.msk [vmem:[#allocation2 + $0x48] sm:$0xff] %vm1230, %v1153
        %1241 = vst.msk [vmem:[#allocation2 + $0x50] sm:$0xff] %vm1230, %v1155
        %1242 = vst.msk [vmem:[#allocation2 + $0x58] sm:$0xff] %vm1230, %v1157
        %1243 = vst.msk [vmem:[#allocation2 + $0x60] sm:$0xff] %vm1230, %v1159
        %1244 = vst.msk [vmem:[#allocation2 + $0x68] sm:$0xff] %vm1230, %v1161
        %1245 = vst.msk [vmem:[#allocation2 + $0x70] sm:$0xff] %vm1230, %v1163
        %1246 = vst.msk [vmem:[#allocation2 + $0x78] sm:$0xff] %vm1230, %v1165
        %1247 = vst.msk [vmem:[#allocation2 + $0x80] sm:$0xff] %vm1230, %v1167
        %1248 = vst.msk [vmem:[#allocation2 + $0x88] sm:$0xff] %vm1230, %v1169
        %1249 = vst.msk [vmem:[#allocation2 + $0x90] sm:$0xff] %vm1230, %v1171
        %1250 = vst.msk [vmem:[#allocation2 + $0x98] sm:$0xff] %vm1230, %v1173
        %1251 = vst.msk [vmem:[#allocation2 + $0xa0] sm:$0xff] %vm1230, %v1175
        %1252 = vst.msk [vmem:[#allocation2 + $0xa8] sm:$0xff] %vm1230, %v1177
        %1253 = vst.msk [vmem:[#allocation2 + $0xb0] sm:$0xff] %vm1230, %v1179
        %1254 = vst.msk [vmem:[#allocation2 + $0xb8] sm:$0xff] %vm1230, %v1181
        %1255 = vst.msk [vmem:[#allocation2 + $0xc0] sm:$0xff] %vm1230, %v1183
        %1256 = vst.msk [vmem:[#allocation2 + $0xc8] sm:$0xff] %vm1230, %v1185
        %1257 = vst.msk [vmem:[#allocation2 + $0xd0] sm:$0xff] %vm1230, %v1187
        %1258 = vst.msk [vmem:[#allocation2 + $0xd8] sm:$0xff] %vm1230, %v1189
        %1259 = vst.msk [vmem:[#allocation2 + $0xe0] sm:$0xff] %vm1230, %v1191
        %1260 = vst.msk [vmem:[#allocation2 + $0xe8] sm:$0xff] %vm1230, %v1193
        %1261 = vst.msk [vmem:[#allocation2 + $0xf0] sm:$0xff] %vm1230, %v1195
        %1262 = vst.msk [vmem:[#allocation2 + $0xf8] sm:$0xff] %vm1230, %v1197
        %s1263 = sadd.s32 %s227, 2
        %s1264 = smul.u32 %s1263, 24
        %s1265 = scalar_lea.vmem %s225, %s1264
        %v1266 = vld [vmem:[%s1265] sm:$0xff]
        %v1267 = vld [vmem:[%s1265 + $0x8] sm:$0xff]
        %v1268 = vld [vmem:[%s1265 + $0x18] sm:$0xff]
        %v1269 = vld [vmem:[%s1265 + $0x20] sm:$0xff]
        %v1270 = vld [vmem:[%s1265 + $0x30] sm:$0xff]
        %v1271 = vld [vmem:[%s1265 + $0x38] sm:$0xff]
        %v1272 = vld [vmem:[%s1265 + $0x48] sm:$0xff]
        %v1273 = vld [vmem:[%s1265 + $0x50] sm:$0xff]
        %v1274 = vld [vmem:[%s1265 + $0x60] sm:$0xff]
        %v1275 = vld [vmem:[%s1265 + $0x68] sm:$0xff]
        %v1276 = vld [vmem:[%s1265 + $0x78] sm:$0xff]
        %v1277 = vld [vmem:[%s1265 + $0x80] sm:$0xff]
        %v1278 = vld [vmem:[%s1265 + $0x90] sm:$0xff]
        %v1279 = vld [vmem:[%s1265 + $0x98] sm:$0xff]
        %v1280 = vld [vmem:[%s1265 + $0xa8] sm:$0xff]
        %v1281 = vld [vmem:[%s1265 + $0xb0] sm:$0xff]
        %v1282 = vld [vmem:[%s1265 + $0xc0] sm:$0xff]
        %v1283 = vld [vmem:[%s1265 + $0xc8] sm:$0xff]
        %v1284 = vld [vmem:[%s1265 + $0xd8] sm:$0xff]
        %v1285 = vld [vmem:[%s1265 + $0xe0] sm:$0xff]
        %v1286 = vld [vmem:[%s1265 + $0xf0] sm:$0xff]
        %v1287 = vld [vmem:[%s1265 + $0xf8] sm:$0xff]
        %v1288 = vld [vmem:[%s1265 + $0x108] sm:$0xff]
        %v1289 = vld [vmem:[%s1265 + $0x110] sm:$0xff]
        %v1290 = vld [vmem:[%s1265 + $0x120] sm:$0xff]
        %v1291 = vld [vmem:[%s1265 + $0x128] sm:$0xff]
        %v1292 = vld [vmem:[%s1265 + $0x138] sm:$0xff]
        %v1293 = vld [vmem:[%s1265 + $0x140] sm:$0xff]
        %v1294 = vld [vmem:[%s1265 + $0x150] sm:$0xff]
        %v1295 = vld [vmem:[%s1265 + $0x158] sm:$0xff]
        %v1296 = vld [vmem:[%s1265 + $0x168] sm:$0xff]
        %v1297 = vld [vmem:[%s1265 + $0x170] sm:$0xff]
        %1330 = vrot.lane.b32.xlu0 %v1266, 24
        %v1331 = vpop.permute.xlu0 %1330
        %1332 = vrot.lane.b32.xlu0 %v1267, 24
        %v1333 = vpop.permute.xlu0 %1332
        %1334 = vrot.lane.b32.xlu0 %v1268, 24
        %v1335 = vpop.permute.xlu0 %1334
        %1336 = vrot.lane.b32.xlu0 %v1269, 24
        %v1337 = vpop.permute.xlu0 %1336
        %1338 = vrot.lane.b32.xlu0 %v1270, 24
        %v1339 = vpop.permute.xlu0 %1338
        %1340 = vrot.lane.b32.xlu0 %v1271, 24
        %v1341 = vpop.permute.xlu0 %1340
        %1342 = vrot.lane.b32.xlu0 %v1272, 24
        %v1343 = vpop.permute.xlu0 %1342
        %1344 = vrot.lane.b32.xlu0 %v1273, 24
        %v1345 = vpop.permute.xlu0 %1344
        %1346 = vrot.lane.b32.xlu0 %v1274, 24
        %v1347 = vpop.permute.xlu0 %1346
        %1348 = vrot.lane.b32.xlu0 %v1275, 24
        %v1349 = vpop.permute.xlu0 %1348
        %1350 = vrot.lane.b32.xlu0 %v1276, 24
        %v1351 = vpop.permute.xlu0 %1350
        %1352 = vrot.lane.b32.xlu0 %v1277, 24
        %v1353 = vpop.permute.xlu0 %1352
        %1354 = vrot.lane.b32.xlu0 %v1278, 24
        %v1355 = vpop.permute.xlu0 %1354
        %1356 = vrot.lane.b32.xlu0 %v1279, 24
        %v1357 = vpop.permute.xlu0 %1356
        %1358 = vrot.lane.b32.xlu0 %v1280, 24
        %v1359 = vpop.permute.xlu0 %1358
        %1360 = vrot.lane.b32.xlu0 %v1281, 24
        %v1361 = vpop.permute.xlu0 %1360
        %1362 = vrot.lane.b32.xlu0 %v1282, 24
        %v1363 = vpop.permute.xlu0 %1362
        %1364 = vrot.lane.b32.xlu0 %v1283, 24
        %v1365 = vpop.permute.xlu0 %1364
        %1366 = vrot.lane.b32.xlu0 %v1284, 24
        %v1367 = vpop.permute.xlu0 %1366
        %1368 = vrot.lane.b32.xlu0 %v1285, 24
        %v1369 = vpop.permute.xlu0 %1368
        %1370 = vrot.lane.b32.xlu0 %v1286, 24
        %v1371 = vpop.permute.xlu0 %1370
        %1372 = vrot.lane.b32.xlu0 %v1287, 24
        %v1373 = vpop.permute.xlu0 %1372
        %1374 = vrot.lane.b32.xlu0 %v1288, 24
        %v1375 = vpop.permute.xlu0 %1374
        %1376 = vrot.lane.b32.xlu0 %v1289, 24
        %v1377 = vpop.permute.xlu0 %1376
        %1378 = vrot.lane.b32.xlu0 %v1290, 24
        %v1379 = vpop.permute.xlu0 %1378
        %1380 = vrot.lane.b32.xlu0 %v1291, 24
        %v1381 = vpop.permute.xlu0 %1380
        %1382 = vrot.lane.b32.xlu0 %v1292, 24
        %v1383 = vpop.permute.xlu0 %1382
        %1384 = vrot.lane.b32.xlu0 %v1293, 24
        %v1385 = vpop.permute.xlu0 %1384
        %1386 = vrot.lane.b32.xlu0 %v1294, 24
        %v1387 = vpop.permute.xlu0 %1386
        %1388 = vrot.lane.b32.xlu0 %v1295, 24
        %v1389 = vpop.permute.xlu0 %1388
        %1390 = vrot.lane.b32.xlu0 %v1296, 24
        %v1391 = vpop.permute.xlu0 %1390
        %1392 = vrot.lane.b32.xlu0 %v1297, 24
        %v1393 = vpop.permute.xlu0 %1392
        %vm1426 = vcmask 228544
        %1427 = vst.msk [vmem:[#allocation2] sm:$0xff] %vm1426, %v1331
        %1428 = vst.msk [vmem:[#allocation2 + $0x8] sm:$0xff] %vm1426, %v1333
        %1429 = vst.msk [vmem:[#allocation2 + $0x10] sm:$0xff] %vm1426, %v1335
        %1430 = vst.msk [vmem:[#allocation2 + $0x18] sm:$0xff] %vm1426, %v1337
        %1431 = vst.msk [vmem:[#allocation2 + $0x20] sm:$0xff] %vm1426, %v1339
        %1432 = vst.msk [vmem:[#allocation2 + $0x28] sm:$0xff] %vm1426, %v1341
        %1433 = vst.msk [vmem:[#allocation2 + $0x30] sm:$0xff] %vm1426, %v1343
        %1434 = vst.msk [vmem:[#allocation2 + $0x38] sm:$0xff] %vm1426, %v1345
        %1435 = vst.msk [vmem:[#allocation2 + $0x40] sm:$0xff] %vm1426, %v1347
        %1436 = vst.msk [vmem:[#allocation2 + $0x48] sm:$0xff] %vm1426, %v1349
        %1437 = vst.msk [vmem:[#allocation2 + $0x50] sm:$0xff] %vm1426, %v1351
        %1438 = vst.msk [vmem:[#allocation2 + $0x58] sm:$0xff] %vm1426, %v1353
        %1439 = vst.msk [vmem:[#allocation2 + $0x60] sm:$0xff] %vm1426, %v1355
        %1440 = vst.msk [vmem:[#allocation2 + $0x68] sm:$0xff] %vm1426, %v1357
        %1441 = vst.msk [vmem:[#allocation2 + $0x70] sm:$0xff] %vm1426, %v1359
        %1442 = vst.msk [vmem:[#allocation2 + $0x78] sm:$0xff] %vm1426, %v1361
        %1443 = vst.msk [vmem:[#allocation2 + $0x80] sm:$0xff] %vm1426, %v1363
        %1444 = vst.msk [vmem:[#allocation2 + $0x88] sm:$0xff] %vm1426, %v1365
        %1445 = vst.msk [vmem:[#allocation2 + $0x90] sm:$0xff] %vm1426, %v1367
        %1446 = vst.msk [vmem:[#allocation2 + $0x98] sm:$0xff] %vm1426, %v1369
        %1447 = vst.msk [vmem:[#allocation2 + $0xa0] sm:$0xff] %vm1426, %v1371
        %1448 = vst.msk [vmem:[#allocation2 + $0xa8] sm:$0xff] %vm1426, %v1373
        %1449 = vst.msk [vmem:[#allocation2 + $0xb0] sm:$0xff] %vm1426, %v1375
        %1450 = vst.msk [vmem:[#allocation2 + $0xb8] sm:$0xff] %vm1426, %v1377
        %1451 = vst.msk [vmem:[#allocation2 + $0xc0] sm:$0xff] %vm1426, %v1379
        %1452 = vst.msk [vmem:[#allocation2 + $0xc8] sm:$0xff] %vm1426, %v1381
        %1453 = vst.msk [vmem:[#allocation2 + $0xd0] sm:$0xff] %vm1426, %v1383
        %1454 = vst.msk [vmem:[#allocation2 + $0xd8] sm:$0xff] %vm1426, %v1385
        %1455 = vst.msk [vmem:[#allocation2 + $0xe0] sm:$0xff] %vm1426, %v1387
        %1456 = vst.msk [vmem:[#allocation2 + $0xe8] sm:$0xff] %vm1426, %v1389
        %1457 = vst.msk [vmem:[#allocation2 + $0xf0] sm:$0xff] %vm1426, %v1391
        %1458 = vst.msk [vmem:[#allocation2 + $0xf8] sm:$0xff] %vm1426, %v1393
        %v1459 = vld [vmem:[%s1265 + $0x1] sm:$0xff]
        %v1460 = vld [vmem:[%s1265 + $0x9] sm:$0xff]
        %v1461 = vld [vmem:[%s1265 + $0x19] sm:$0xff]
        %v1462 = vld [vmem:[%s1265 + $0x21] sm:$0xff]
        %v1463 = vld [vmem:[%s1265 + $0x31] sm:$0xff]
        %v1464 = vld [vmem:[%s1265 + $0x39] sm:$0xff]
        %v1465 = vld [vmem:[%s1265 + $0x49] sm:$0xff]
        %v1466 = vld [vmem:[%s1265 + $0x51] sm:$0xff]
        %v1467 = vld [vmem:[%s1265 + $0x61] sm:$0xff]
        %v1468 = vld [vmem:[%s1265 + $0x69] sm:$0xff]
        %v1469 = vld [vmem:[%s1265 + $0x79] sm:$0xff]
        %v1470 = vld [vmem:[%s1265 + $0x81] sm:$0xff]
        %v1471 = vld [vmem:[%s1265 + $0x91] sm:$0xff]
        %v1472 = vld [vmem:[%s1265 + $0x99] sm:$0xff]
        %v1473 = vld [vmem:[%s1265 + $0xa9] sm:$0xff]
        %v1474 = vld [vmem:[%s1265 + $0xb1] sm:$0xff]
        %v1475 = vld [vmem:[%s1265 + $0xc1] sm:$0xff]
        %v1476 = vld [vmem:[%s1265 + $0xc9] sm:$0xff]
        %v1477 = vld [vmem:[%s1265 + $0xd9] sm:$0xff]
        %v1478 = vld [vmem:[%s1265 + $0xe1] sm:$0xff]
        %v1479 = vld [vmem:[%s1265 + $0xf1] sm:$0xff]
        %v1480 = vld [vmem:[%s1265 + $0xf9] sm:$0xff]
        %v1481 = vld [vmem:[%s1265 + $0x109] sm:$0xff]
        %v1482 = vld [vmem:[%s1265 + $0x111] sm:$0xff]
        %v1483 = vld [vmem:[%s1265 + $0x121] sm:$0xff]
        %v1484 = vld [vmem:[%s1265 + $0x129] sm:$0xff]
        %v1485 = vld [vmem:[%s1265 + $0x139] sm:$0xff]
        %v1486 = vld [vmem:[%s1265 + $0x141] sm:$0xff]
        %v1487 = vld [vmem:[%s1265 + $0x151] sm:$0xff]
        %v1488 = vld [vmem:[%s1265 + $0x159] sm:$0xff]
        %v1489 = vld [vmem:[%s1265 + $0x169] sm:$0xff]
        %v1490 = vld [vmem:[%s1265 + $0x171] sm:$0xff]
        %1523 = vrot.lane.b32.xlu0 %v1459, 28
        %v1524 = vpop.permute.xlu0 %1523
        %1525 = vrot.lane.b32.xlu0 %v1460, 28
        %v1526 = vpop.permute.xlu0 %1525
        %1527 = vrot.lane.b32.xlu0 %v1461, 28
        %v1528 = vpop.permute.xlu0 %1527
        %1529 = vrot.lane.b32.xlu0 %v1462, 28
        %v1530 = vpop.permute.xlu0 %1529
        %1531 = vrot.lane.b32.xlu0 %v1463, 28
        %v1532 = vpop.permute.xlu0 %1531
        %1533 = vrot.lane.b32.xlu0 %v1464, 28
        %v1534 = vpop.permute.xlu0 %1533
        %1535 = vrot.lane.b32.xlu0 %v1465, 28
        %v1536 = vpop.permute.xlu0 %1535
        %1537 = vrot.lane.b32.xlu0 %v1466, 28
        %v1538 = vpop.permute.xlu0 %1537
        %1539 = vrot.lane.b32.xlu0 %v1467, 28
        %v1540 = vpop.permute.xlu0 %1539
        %1541 = vrot.lane.b32.xlu0 %v1468, 28
        %v1542 = vpop.permute.xlu0 %1541
        %1543 = vrot.lane.b32.xlu0 %v1469, 28
        %v1544 = vpop.permute.xlu0 %1543
        %1545 = vrot.lane.b32.xlu0 %v1470, 28
        %v1546 = vpop.permute.xlu0 %1545
        %1547 = vrot.lane.b32.xlu0 %v1471, 28
        %v1548 = vpop.permute.xlu0 %1547
        %1549 = vrot.lane.b32.xlu0 %v1472, 28
        %v1550 = vpop.permute.xlu0 %1549
        %1551 = vrot.lane.b32.xlu0 %v1473, 28
        %v1552 = vpop.permute.xlu0 %1551
        %1553 = vrot.lane.b32.xlu0 %v1474, 28
        %v1554 = vpop.permute.xlu0 %1553
        %1555 = vrot.lane.b32.xlu0 %v1475, 28
        %v1556 = vpop.permute.xlu0 %1555
        %1557 = vrot.lane.b32.xlu0 %v1476, 28
        %v1558 = vpop.permute.xlu0 %1557
        %1559 = vrot.lane.b32.xlu0 %v1477, 28
        %v1560 = vpop.permute.xlu0 %1559
        %1561 = vrot.lane.b32.xlu0 %v1478, 28
        %v1562 = vpop.permute.xlu0 %1561
        %1563 = vrot.lane.b32.xlu0 %v1479, 28
        %v1564 = vpop.permute.xlu0 %1563
        %1565 = vrot.lane.b32.xlu0 %v1480, 28
        %v1566 = vpop.permute.xlu0 %1565
        %1567 = vrot.lane.b32.xlu0 %v1481, 28
        %v1568 = vpop.permute.xlu0 %1567
        %1569 = vrot.lane.b32.xlu0 %v1482, 28
        %v1570 = vpop.permute.xlu0 %1569
        %1571 = vrot.lane.b32.xlu0 %v1483, 28
        %v1572 = vpop.permute.xlu0 %1571
        %1573 = vrot.lane.b32.xlu0 %v1484, 28
        %v1574 = vpop.permute.xlu0 %1573
        %1575 = vrot.lane.b32.xlu0 %v1485, 28
        %v1576 = vpop.permute.xlu0 %1575
        %1577 = vrot.lane.b32.xlu0 %v1486, 28
        %v1578 = vpop.permute.xlu0 %1577
        %1579 = vrot.lane.b32.xlu0 %v1487, 28
        %v1580 = vpop.permute.xlu0 %1579
        %1581 = vrot.lane.b32.xlu0 %v1488, 28
        %v1582 = vpop.permute.xlu0 %1581
        %1583 = vrot.lane.b32.xlu0 %v1489, 28
        %v1584 = vpop.permute.xlu0 %1583
        %1585 = vrot.lane.b32.xlu0 %v1490, 28
        %v1586 = vpop.permute.xlu0 %1585
        %vm1619 = vcmask 261344
        %1620 = vst.msk [vmem:[#allocation2] sm:$0xff] %vm1619, %v1524
        %1621 = vst.msk [vmem:[#allocation2 + $0x8] sm:$0xff] %vm1619, %v1526
        %1622 = vst.msk [vmem:[#allocation2 + $0x10] sm:$0xff] %vm1619, %v1528
        %1623 = vst.msk [vmem:[#allocation2 + $0x18] sm:$0xff] %vm1619, %v1530
        %1624 = vst.msk [vmem:[#allocation2 + $0x20] sm:$0xff] %vm1619, %v1532
        %1625 = vst.msk [vmem:[#allocation2 + $0x28] sm:$0xff] %vm1619, %v1534
        %1626 = vst.msk [vmem:[#allocation2 + $0x30] sm:$0xff] %vm1619, %v1536
        %1627 = vst.msk [vmem:[#allocation2 + $0x38] sm:$0xff] %vm1619, %v1538
        %1628 = vst.msk [vmem:[#allocation2 + $0x40] sm:$0xff] %vm1619, %v1540
        %1629 = vst.msk [vmem:[#allocation2 + $0x48] sm:$0xff] %vm1619, %v1542
        %1630 = vst.msk [vmem:[#allocation2 + $0x50] sm:$0xff] %vm1619, %v1544
        %1631 = vst.msk [vmem:[#allocation2 + $0x58] sm:$0xff] %vm1619, %v1546
        %1632 = vst.msk [vmem:[#allocation2 + $0x60] sm:$0xff] %vm1619, %v1548
        %1633 = vst.msk [vmem:[#allocation2 + $0x68] sm:$0xff] %vm1619, %v1550
        %1634 = vst.msk [vmem:[#allocation2 + $0x70] sm:$0xff] %vm1619, %v1552
        %1635 = vst.msk [vmem:[#allocation2 + $0x78] sm:$0xff] %vm1619, %v1554
        %1636 = vst.msk [vmem:[#allocation2 + $0x80] sm:$0xff] %vm1619, %v1556
        %1637 = vst.msk [vmem:[#allocation2 + $0x88] sm:$0xff] %vm1619, %v1558
        %1638 = vst.msk [vmem:[#allocation2 + $0x90] sm:$0xff] %vm1619, %v1560
        %1639 = vst.msk [vmem:[#allocation2 + $0x98] sm:$0xff] %vm1619, %v1562
        %1640 = vst.msk [vmem:[#allocation2 + $0xa0] sm:$0xff] %vm1619, %v1564
        %1641 = vst.msk [vmem:[#allocation2 + $0xa8] sm:$0xff] %vm1619, %v1566
        %1642 = vst.msk [vmem:[#allocation2 + $0xb0] sm:$0xff] %vm1619, %v1568
        %1643 = vst.msk [vmem:[#allocation2 + $0xb8] sm:$0xff] %vm1619, %v1570
        %1644 = vst.msk [vmem:[#allocation2 + $0xc0] sm:$0xff] %vm1619, %v1572
        %1645 = vst.msk [vmem:[#allocation2 + $0xc8] sm:$0xff] %vm1619, %v1574
        %1646 = vst.msk [vmem:[#allocation2 + $0xd0] sm:$0xff] %vm1619, %v1576
        %1647 = vst.msk [vmem:[#allocation2 + $0xd8] sm:$0xff] %vm1619, %v1578
        %1648 = vst.msk [vmem:[#allocation2 + $0xe0] sm:$0xff] %vm1619, %v1580
        %1649 = vst.msk [vmem:[#allocation2 + $0xe8] sm:$0xff] %vm1619, %v1582
        %1650 = vst.msk [vmem:[#allocation2 + $0xf0] sm:$0xff] %vm1619, %v1584
        %1651 = vst.msk [vmem:[#allocation2 + $0xf8] sm:$0xff] %vm1619, %v1586
        %v1652 = vld [vmem:[%s1265 + $0x2] sm:$0xff]
        %v1653 = vld [vmem:[%s1265 + $0xa] sm:$0xff]
        %v1654 = vld [vmem:[%s1265 + $0x1a] sm:$0xff]
        %v1655 = vld [vmem:[%s1265 + $0x22] sm:$0xff]
        %v1656 = vld [vmem:[%s1265 + $0x32] sm:$0xff]
        %v1657 = vld [vmem:[%s1265 + $0x3a] sm:$0xff]
        %v1658 = vld [vmem:[%s1265 + $0x4a] sm:$0xff]
        %v1659 = vld [vmem:[%s1265 + $0x52] sm:$0xff]
        %v1660 = vld [vmem:[%s1265 + $0x62] sm:$0xff]
        %v1661 = vld [vmem:[%s1265 + $0x6a] sm:$0xff]
        %v1662 = vld [vmem:[%s1265 + $0x7a] sm:$0xff]
        %v1663 = vld [vmem:[%s1265 + $0x82] sm:$0xff]
        %v1664 = vld [vmem:[%s1265 + $0x92] sm:$0xff]
        %v1665 = vld [vmem:[%s1265 + $0x9a] sm:$0xff]
        %v1666 = vld [vmem:[%s1265 + $0xaa] sm:$0xff]
        %v1667 = vld [vmem:[%s1265 + $0xb2] sm:$0xff]
        %v1668 = vld [vmem:[%s1265 + $0xc2] sm:$0xff]
        %v1669 = vld [vmem:[%s1265 + $0xca] sm:$0xff]
        %v1670 = vld [vmem:[%s1265 + $0xda] sm:$0xff]
        %v1671 = vld [vmem:[%s1265 + $0xe2] sm:$0xff]
        %v1672 = vld [vmem:[%s1265 + $0xf2] sm:$0xff]
        %v1673 = vld [vmem:[%s1265 + $0xfa] sm:$0xff]
        %v1674 = vld [vmem:[%s1265 + $0x10a] sm:$0xff]
        %v1675 = vld [vmem:[%s1265 + $0x112] sm:$0xff]
        %v1676 = vld [vmem:[%s1265 + $0x122] sm:$0xff]
        %v1677 = vld [vmem:[%s1265 + $0x12a] sm:$0xff]
        %v1678 = vld [vmem:[%s1265 + $0x13a] sm:$0xff]
        %v1679 = vld [vmem:[%s1265 + $0x142] sm:$0xff]
        %v1680 = vld [vmem:[%s1265 + $0x152] sm:$0xff]
        %v1681 = vld [vmem:[%s1265 + $0x15a] sm:$0xff]
        %v1682 = vld [vmem:[%s1265 + $0x16a] sm:$0xff]
        %v1683 = vld [vmem:[%s1265 + $0x172] sm:$0xff]
        %1716 = vrot.lane.b32.xlu0 %v1652, 32
        %v1717 = vpop.permute.xlu0 %1716
        %1718 = vrot.lane.b32.xlu0 %v1653, 32
        %v1719 = vpop.permute.xlu0 %1718
        %1720 = vrot.lane.b32.xlu0 %v1654, 32
        %v1721 = vpop.permute.xlu0 %1720
        %1722 = vrot.lane.b32.xlu0 %v1655, 32
        %v1723 = vpop.permute.xlu0 %1722
        %1724 = vrot.lane.b32.xlu0 %v1656, 32
        %v1725 = vpop.permute.xlu0 %1724
        %1726 = vrot.lane.b32.xlu0 %v1657, 32
        %v1727 = vpop.permute.xlu0 %1726
        %1728 = vrot.lane.b32.xlu0 %v1658, 32
        %v1729 = vpop.permute.xlu0 %1728
        %1730 = vrot.lane.b32.xlu0 %v1659, 32
        %v1731 = vpop.permute.xlu0 %1730
        %1732 = vrot.lane.b32.xlu0 %v1660, 32
        %v1733 = vpop.permute.xlu0 %1732
        %1734 = vrot.lane.b32.xlu0 %v1661, 32
        %v1735 = vpop.permute.xlu0 %1734
        %1736 = vrot.lane.b32.xlu0 %v1662, 32
        %v1737 = vpop.permute.xlu0 %1736
        %1738 = vrot.lane.b32.xlu0 %v1663, 32
        %v1739 = vpop.permute.xlu0 %1738
        %1740 = vrot.lane.b32.xlu0 %v1664, 32
        %v1741 = vpop.permute.xlu0 %1740
        %1742 = vrot.lane.b32.xlu0 %v1665, 32
        %v1743 = vpop.permute.xlu0 %1742
        %1744 = vrot.lane.b32.xlu0 %v1666, 32
        %v1745 = vpop.permute.xlu0 %1744
        %1746 = vrot.lane.b32.xlu0 %v1667, 32
        %v1747 = vpop.permute.xlu0 %1746
        %1748 = vrot.lane.b32.xlu0 %v1668, 32
        %v1749 = vpop.permute.xlu0 %1748
        %1750 = vrot.lane.b32.xlu0 %v1669, 32
        %v1751 = vpop.permute.xlu0 %1750
        %1752 = vrot.lane.b32.xlu0 %v1670, 32
        %v1753 = vpop.permute.xlu0 %1752
        %1754 = vrot.lane.b32.xlu0 %v1671, 32
        %v1755 = vpop.permute.xlu0 %1754
        %1756 = vrot.lane.b32.xlu0 %v1672, 32
        %v1757 = vpop.permute.xlu0 %1756
        %1758 = vrot.lane.b32.xlu0 %v1673, 32
        %v1759 = vpop.permute.xlu0 %1758
        %1760 = vrot.lane.b32.xlu0 %v1674, 32
        %v1761 = vpop.permute.xlu0 %1760
        %1762 = vrot.lane.b32.xlu0 %v1675, 32
        %v1763 = vpop.permute.xlu0 %1762
        %1764 = vrot.lane.b32.xlu0 %v1676, 32
        %v1765 = vpop.permute.xlu0 %1764
        %1766 = vrot.lane.b32.xlu0 %v1677, 32
        %v1767 = vpop.permute.xlu0 %1766
        %1768 = vrot.lane.b32.xlu0 %v1678, 32
        %v1769 = vpop.permute.xlu0 %1768
        %1770 = vrot.lane.b32.xlu0 %v1679, 32
        %v1771 = vpop.permute.xlu0 %1770
        %1772 = vrot.lane.b32.xlu0 %v1680, 32
        %v1773 = vpop.permute.xlu0 %1772
        %1774 = vrot.lane.b32.xlu0 %v1681, 32
        %v1775 = vpop.permute.xlu0 %1774
        %1776 = vrot.lane.b32.xlu0 %v1682, 32
        %v1777 = vpop.permute.xlu0 %1776
        %1778 = vrot.lane.b32.xlu0 %v1683, 32
        %v1779 = vpop.permute.xlu0 %1778
        %vm1812 = vcmask 294144
        %1813 = vst.msk [vmem:[#allocation2] sm:$0xff] %vm1812, %v1717
        %1814 = vst.msk [vmem:[#allocation2 + $0x8] sm:$0xff] %vm1812, %v1719
        %1815 = vst.msk [vmem:[#allocation2 + $0x10] sm:$0xff] %vm1812, %v1721
        %1816 = vst.msk [vmem:[#allocation2 + $0x18] sm:$0xff] %vm1812, %v1723
        %1817 = vst.msk [vmem:[#allocation2 + $0x20] sm:$0xff] %vm1812, %v1725
        %1818 = vst.msk [vmem:[#allocation2 + $0x28] sm:$0xff] %vm1812, %v1727
        %1819 = vst.msk [vmem:[#allocation2 + $0x30] sm:$0xff] %vm1812, %v1729
        %1820 = vst.msk [vmem:[#allocation2 + $0x38] sm:$0xff] %vm1812, %v1731
        %1821 = vst.msk [vmem:[#allocation2 + $0x40] sm:$0xff] %vm1812, %v1733
        %1822 = vst.msk [vmem:[#allocation2 + $0x48] sm:$0xff] %vm1812, %v1735
        %1823 = vst.msk [vmem:[#allocation2 + $0x50] sm:$0xff] %vm1812, %v1737
        %1824 = vst.msk [vmem:[#allocation2 + $0x58] sm:$0xff] %vm1812, %v1739
        %1825 = vst.msk [vmem:[#allocation2 + $0x60] sm:$0xff] %vm1812, %v1741
        %1826 = vst.msk [vmem:[#allocation2 + $0x68] sm:$0xff] %vm1812, %v1743
        %1827 = vst.msk [vmem:[#allocation2 + $0x70] sm:$0xff] %vm1812, %v1745
        %1828 = vst.msk [vmem:[#allocation2 + $0x78] sm:$0xff] %vm1812, %v1747
        %1829 = vst.msk [vmem:[#allocation2 + $0x80] sm:$0xff] %vm1812, %v1749
        %1830 = vst.msk [vmem:[#allocation2 + $0x88] sm:$0xff] %vm1812, %v1751
        %1831 = vst.msk [vmem:[#allocation2 + $0x90] sm:$0xff] %vm1812, %v1753
        %1832 = vst.msk [vmem:[#allocation2 + $0x98] sm:$0xff] %vm1812, %v1755
        %1833 = vst.msk [vmem:[#allocation2 + $0xa0] sm:$0xff] %vm1812, %v1757
        %1834 = vst.msk [vmem:[#allocation2 + $0xa8] sm:$0xff] %vm1812, %v1759
        %1835 = vst.msk [vmem:[#allocation2 + $0xb0] sm:$0xff] %vm1812, %v1761
        %1836 = vst.msk [vmem:[#allocation2 + $0xb8] sm:$0xff] %vm1812, %v1763
        %1837 = vst.msk [vmem:[#allocation2 + $0xc0] sm:$0xff] %vm1812, %v1765
        %1838 = vst.msk [vmem:[#allocation2 + $0xc8] sm:$0xff] %vm1812, %v1767
        %1839 = vst.msk [vmem:[#allocation2 + $0xd0] sm:$0xff] %vm1812, %v1769
        %1840 = vst.msk [vmem:[#allocation2 + $0xd8] sm:$0xff] %vm1812, %v1771
        %1841 = vst.msk [vmem:[#allocation2 + $0xe0] sm:$0xff] %vm1812, %v1773
        %1842 = vst.msk [vmem:[#allocation2 + $0xe8] sm:$0xff] %vm1812, %v1775
        %1843 = vst.msk [vmem:[#allocation2 + $0xf0] sm:$0xff] %vm1812, %v1777
        %1844 = vst.msk [vmem:[#allocation2 + $0xf8] sm:$0xff] %vm1812, %v1779
        %v1845 = vld [vmem:[#allocation2] sm:$0xff]
        %v1846 = vld [vmem:[#allocation2 + $0x8] sm:$0xff]
        %v1847 = vld [vmem:[#allocation2 + $0x10] sm:$0xff]
        %v1848 = vld [vmem:[#allocation2 + $0x18] sm:$0xff]
        %v1849 = vld [vmem:[#allocation2 + $0x20] sm:$0xff]
        %v1850 = vld [vmem:[#allocation2 + $0x28] sm:$0xff]
        %v1851 = vld [vmem:[#allocation2 + $0x30] sm:$0xff]
        %v1852 = vld [vmem:[#allocation2 + $0x38] sm:$0xff]
        %v1853 = vld [vmem:[#allocation2 + $0x40] sm:$0xff]
        %v1854 = vld [vmem:[#allocation2 + $0x48] sm:$0xff]
        %v1855 = vld [vmem:[#allocation2 + $0x50] sm:$0xff]
        %v1856 = vld [vmem:[#allocation2 + $0x58] sm:$0xff]
        %v1857 = vld [vmem:[#allocation2 + $0x60] sm:$0xff]
        %v1858 = vld [vmem:[#allocation2 + $0x68] sm:$0xff]
        %v1859 = vld [vmem:[#allocation2 + $0x70] sm:$0xff]
        %v1860 = vld [vmem:[#allocation2 + $0x78] sm:$0xff]
        %v1861 = vld [vmem:[#allocation2 + $0x80] sm:$0xff]
        %v1862 = vld [vmem:[#allocation2 + $0x88] sm:$0xff]
        %v1863 = vld [vmem:[#allocation2 + $0x90] sm:$0xff]
        %v1864 = vld [vmem:[#allocation2 + $0x98] sm:$0xff]
        %v1865 = vld [vmem:[#allocation2 + $0xa0] sm:$0xff]
        %v1866 = vld [vmem:[#allocation2 + $0xa8] sm:$0xff]
        %v1867 = vld [vmem:[#allocation2 + $0xb0] sm:$0xff]
        %v1868 = vld [vmem:[#allocation2 + $0xb8] sm:$0xff]
        %v1869 = vld [vmem:[#allocation2 + $0xc0] sm:$0xff]
        %v1870 = vld [vmem:[#allocation2 + $0xc8] sm:$0xff]
        %v1871 = vld [vmem:[#allocation2 + $0xd0] sm:$0xff]
        %v1872 = vld [vmem:[#allocation2 + $0xd8] sm:$0xff]
        %v1873 = vld [vmem:[#allocation2 + $0xe0] sm:$0xff]
        %v1874 = vld [vmem:[#allocation2 + $0xe8] sm:$0xff]
        %v1875 = vld [vmem:[#allocation2 + $0xf0] sm:$0xff]
        %v1876 = vld [vmem:[#allocation2 + $0xf8] sm:$0xff]
        %v1877 = vld [vmem:[%s1] sm:$0xff]
        %v1878 = vld [vmem:[%s1 + $0x8] sm:$0xff]
        %v1879 = vld [vmem:[%s1 + $0x10] sm:$0xff]
        %v1880 = vld [vmem:[%s1 + $0x18] sm:$0xff]
        %v1881 = vld [vmem:[%s1 + $0x20] sm:$0xf]
        %vm1882 = vcmask 293888
        %v1884 = vsel %vm1882, %v1845, 0
        %v1887 = vsel %vm1882, %v1846, 0
        %v1890 = vsel %vm1882, %v1847, 0
        %v1893 = vsel %vm1882, %v1848, 0
        %v1896 = vsel %vm1882, %v1849, 0
        %v1899 = vsel %vm1882, %v1850, 0
        %v1902 = vsel %vm1882, %v1851, 0
        %v1905 = vsel %vm1882, %v1852, 0
        %v1908 = vsel %vm1882, %v1853, 0
        %v1911 = vsel %vm1882, %v1854, 0
        %v1914 = vsel %vm1882, %v1855, 0
        %v1917 = vsel %vm1882, %v1856, 0
        %v1920 = vsel %vm1882, %v1857, 0
        %v1923 = vsel %vm1882, %v1858, 0
        %v1926 = vsel %vm1882, %v1859, 0
        %v1929 = vsel %vm1882, %v1860, 0
        %v1932 = vsel %vm1882, %v1861, 0
        %v1935 = vsel %vm1882, %v1862, 0
        %v1938 = vsel %vm1882, %v1863, 0
        %v1941 = vsel %vm1882, %v1864, 0
        %v1944 = vsel %vm1882, %v1865, 0
        %v1947 = vsel %vm1882, %v1866, 0
        %v1950 = vsel %vm1882, %v1867, 0
        %v1953 = vsel %vm1882, %v1868, 0
        %v1956 = vsel %vm1882, %v1869, 0
        %v1959 = vsel %vm1882, %v1870, 0
        %v1962 = vsel %vm1882, %v1871, 0
        %v1965 = vsel %vm1882, %v1872, 0
        %v1968 = vsel %vm1882, %v1873, 0
        %v1971 = vsel %vm1882, %v1874, 0
        %v1974 = vsel %vm1882, %v1875, 0
        %v1977 = vsel %vm1882, %v1876, 0
        %vm1979 = vcmask 1043456
        %v1981 = vsel %vm1979, %v1881, 0
        %1983 = vmatprep.subr.mxu0 0.0
        %1984 = vmatpush1.msra.mxu0 %v1877
        %1985 = vmatprep.subr.mxu0 0.0
        %1986 = vmatpush1.msra.mxu0 %v1878
        %1987 = vmatprep.subr.mxu0 0.0
        %1988 = vmatpush1.msra.mxu0 %v1879
        %1989 = vmatprep.subr.mxu0 0.0
        %1990 = vmatpush1.msra.mxu0 %v1880
        %1991 = vmatprep.subr.mxu0 0.0
        %1992 = vmatpush1.msra.mxu0 %v1981
        %1993 = vmatprep.subr.mxu0 0.0
        %1994 = vmatpush1.msra.mxu0 0.0
        %1995 = vmatprep.subr.mxu0 0.0
        %1996 = vmatpush1.msra.mxu0 0.0
        %1997 = vmatprep.subr.mxu0 0.0
        %1998 = vmatpush1.msra.mxu0 0.0
        %1999 = vmatprep.subr.mxu0 0.0
        %2000 = vmatpush1.msra.mxu0 0.0
        %2001 = vmatprep.subr.mxu0 0.0
        %2002 = vmatpush1.msra.mxu0 0.0
        %2003 = vmatprep.subr.mxu0 0.0
        %2004 = vmatpush1.msra.mxu0 0.0
        %2005 = vmatprep.subr.mxu0 0.0
        %2006 = vmatpush1.msra.mxu0 0.0
        %2007 = vmatprep.subr.mxu0 0.0
        %2008 = vmatpush1.msra.mxu0 0.0
        %2009 = vmatprep.subr.mxu0 0.0
        %2010 = vmatpush1.msra.mxu0 0.0
        %2011 = vmatprep.subr.mxu0 0.0
        %2012 = vmatpush1.msra.mxu0 0.0
        %2013 = vmatprep.subr.mxu0 0.0
        %2014 = vmatpush1.msra.mxu0 0.0
        %2015 = vmatprep.subr.mxu0 0.0
        %2016 = vmatpush1.msra.mxu0 0.0
        %2017 = vmatprep.subr.mxu0 0.0
        %2018 = vmatpush1.msra.mxu0 0.0
        %2019 = vmatprep.subr.mxu0 0.0
        %2020 = vmatpush1.msra.mxu0 0.0
        %2021 = vmatprep.subr.mxu0 0.0
        %2022 = vmatpush1.msra.mxu0 0.0
        %2023 = vmatprep.subr.mxu0 0.0
        %2024 = vmatpush1.msra.mxu0 0.0
        %2025 = vmatprep.subr.mxu0 0.0
        %2026 = vmatpush1.msra.mxu0 0.0
        %2027 = vmatprep.subr.mxu0 0.0
        %2028 = vmatpush1.msra.mxu0 0.0
        %2029 = vmatprep.subr.mxu0 0.0
        %2030 = vmatpush1.msra.mxu0 0.0
        %2031 = vmatprep.subr.mxu0 0.0
        %2032 = vmatpush1.msra.mxu0 0.0
        %2033 = vmatprep.subr.mxu0 0.0
        %2034 = vmatpush1.msra.mxu0 0.0
        %2035 = vmatprep.subr.mxu0 0.0
        %2036 = vmatpush1.msra.mxu0 0.0
        %2037 = vmatprep.subr.mxu0 0.0
        %2038 = vmatpush1.msra.mxu0 0.0
        %2039 = vmatprep.subr.mxu0 0.0
        %2040 = vmatpush1.msra.mxu0 0.0
        %2041 = vmatprep.subr.mxu0 0.0
        %2042 = vmatpush1.msra.mxu0 0.0
        %2043 = vmatprep.subr.mxu0 0.0
        %2044 = vmatpush1.msra.mxu0 0.0
        %2045 = vmatprep.subr.mxu0 0.0
        %2046 = vmatpush1.msra.mxu0 0.0
        %2047 = vmatprep.mubr.f32.mxu0 0.0
        %2048 = vmatmul.mubr.f32.gmra.mrb[0].mxu0 %v1884
        %v2049 = vpop.f32.mrb[0].mxu0
        %v2050 = vadd.f32 0.0, %v2049
        %v2051 = vpop.f32.mrb[0].mxu0
        %2052 = vmatprep.mubr.f32.mxu0 0.0
        %2053 = vmatmul.mubr.f32.gmra.mrb[0].mxu0 %v1887
        %v2054 = vpop.f32.mrb[0].mxu0
        %v2055 = vadd.f32 0.0, %v2054
        %v2056 = vpop.f32.mrb[0].mxu0
        %2057 = vmatprep.mubr.f32.mxu0 0.0
        %2058 = vmatmul.mubr.f32.gmra.mrb[0].mxu0 %v1890
        %v2059 = vpop.f32.mrb[0].mxu0
        %v2060 = vadd.f32 0.0, %v2059
        %v2061 = vpop.f32.mrb[0].mxu0
        %2062 = vmatprep.mubr.f32.mxu0 0.0
        %2063 = vmatmul.mubr.f32.gmra.mrb[0].mxu0 %v1893
        %v2064 = vpop.f32.mrb[0].mxu0
        %v2065 = vadd.f32 0.0, %v2064
        %v2066 = vpop.f32.mrb[0].mxu0
        %2067 = vmatprep.mubr.f32.mxu0 0.0
        %2068 = vmatmul.mubr.f32.gmra.mrb[0].mxu0 %v1896
        %v2069 = vpop.f32.mrb[0].mxu0
        %v2070 = vadd.f32 0.0, %v2069
        %v2071 = vpop.f32.mrb[0].mxu0
        %2072 = vmatprep.mubr.f32.mxu0 0.0
        %2073 = vmatmul.mubr.f32.gmra.mrb[0].mxu0 %v1899
        %v2074 = vpop.f32.mrb[0].mxu0
        %v2075 = vadd.f32 0.0, %v2074
        %v2076 = vpop.f32.mrb[0].mxu0
        %2077 = vmatprep.mubr.f32.mxu0 0.0
        %2078 = vmatmul.mubr.f32.gmra.mrb[0].mxu0 %v1902
        %v2079 = vpop.f32.mrb[0].mxu0
        %v2080 = vadd.f32 0.0, %v2079
        %v2081 = vpop.f32.mrb[0].mxu0
        %2082 = vmatprep.mubr.f32.mxu0 0.0
        %2083 = vmatmul.mubr.f32.gmra.mrb[0].mxu0 %v1905
        %v2084 = vpop.f32.mrb[0].mxu0
        %v2085 = vadd.f32 0.0, %v2084
        %v2086 = vpop.f32.mrb[0].mxu0
        %2087 = vmatprep.mubr.f32.mxu0 0.0
        %2088 = vmatmul.mubr.f32.gmra.mrb[0].mxu0 %v1908
        %v2089 = vpop.f32.mrb[0].mxu0
        %v2090 = vadd.f32 0.0, %v2089
        %v2091 = vpop.f32.mrb[0].mxu0
        %2092 = vmatprep.mubr.f32.mxu0 0.0
        %2093 = vmatmul.mubr.f32.gmra.mrb[0].mxu0 %v1911
        %v2094 = vpop.f32.mrb[0].mxu0
        %v2095 = vadd.f32 0.0, %v2094
        %v2096 = vpop.f32.mrb[0].mxu0
        %2097 = vmatprep.mubr.f32.mxu0 0.0
        %2098 = vmatmul.mubr.f32.gmra.mrb[0].mxu0 %v1914
        %v2099 = vpop.f32.mrb[0].mxu0
        %v2100 = vadd.f32 0.0, %v2099
        %v2101 = vpop.f32.mrb[0].mxu0
        %2102 = vmatprep.mubr.f32.mxu0 0.0
        %2103 = vmatmul.mubr.f32.gmra.mrb[0].mxu0 %v1917
        %v2104 = vpop.f32.mrb[0].mxu0
        %v2105 = vadd.f32 0.0, %v2104
        %v2106 = vpop.f32.mrb[0].mxu0
        %2107 = vmatprep.mubr.f32.mxu0 0.0
        %2108 = vmatmul.mubr.f32.gmra.mrb[0].mxu0 %v1920
        %v2109 = vpop.f32.mrb[0].mxu0
        %v2110 = vadd.f32 0.0, %v2109
        %v2111 = vpop.f32.mrb[0].mxu0
        %2112 = vmatprep.mubr.f32.mxu0 0.0
        %2113 = vmatmul.mubr.f32.gmra.mrb[0].mxu0 %v1923
        %v2114 = vpop.f32.mrb[0].mxu0
        %v2115 = vadd.f32 0.0, %v2114
        %v2116 = vpop.f32.mrb[0].mxu0
        %2117 = vmatprep.mubr.f32.mxu0 0.0
        %2118 = vmatmul.mubr.f32.gmra.mrb[0].mxu0 %v1926
        %v2119 = vpop.f32.mrb[0].mxu0
        %v2120 = vadd.f32 0.0, %v2119
        %v2121 = vpop.f32.mrb[0].mxu0
        %2122 = vmatprep.mubr.f32.mxu0 0.0
        %2123 = vmatmul.mubr.f32.gmra.mrb[0].mxu0 %v1929
        %v2124 = vpop.f32.mrb[0].mxu0
        %v2125 = vadd.f32 0.0, %v2124
        %v2126 = vpop.f32.mrb[0].mxu0
        %2127 = vmatprep.mubr.f32.mxu0 0.0
        %2128 = vmatmul.mubr.f32.gmra.mrb[0].mxu0 %v1932
        %v2129 = vpop.f32.mrb[0].mxu0
        %v2130 = vadd.f32 0.0, %v2129
        %v2131 = vpop.f32.mrb[0].mxu0
        %2132 = vmatprep.mubr.f32.mxu0 0.0
        %2133 = vmatmul.mubr.f32.gmra.mrb[0].mxu0 %v1935
        %v2134 = vpop.f32.mrb[0].mxu0
        %v2135 = vadd.f32 0.0, %v2134
        %v2136 = vpop.f32.mrb[0].mxu0
        %2137 = vmatprep.mubr.f32.mxu0 0.0
        %2138 = vmatmul.mubr.f32.gmra.mrb[0].mxu0 %v1938
        %v2139 = vpop.f32.mrb[0].mxu0
        %v2140 = vadd.f32 0.0, %v2139
        %v2141 = vpop.f32.mrb[0].mxu0
        %2142 = vmatprep.mubr.f32.mxu0 0.0
        %2143 = vmatmul.mubr.f32.gmra.mrb[0].mxu0 %v1941
        %v2144 = vpop.f32.mrb[0].mxu0
        %v2145 = vadd.f32 0.0, %v2144
        %v2146 = vpop.f32.mrb[0].mxu0
        %2147 = vmatprep.mubr.f32.mxu0 0.0
        %2148 = vmatmul.mubr.f32.gmra.mrb[0].mxu0 %v1944
        %v2149 = vpop.f32.mrb[0].mxu0
        %v2150 = vadd.f32 0.0, %v2149
        %v2151 = vpop.f32.mrb[0].mxu0
        %2152 = vmatprep.mubr.f32.mxu0 0.0
        %2153 = vmatmul.mubr.f32.gmra.mrb[0].mxu0 %v1947
        %v2154 = vpop.f32.mrb[0].mxu0
        %v2155 = vadd.f32 0.0, %v2154
        %v2156 = vpop.f32.mrb[0].mxu0
        %2157 = vmatprep.mubr.f32.mxu0 0.0
        %2158 = vmatmul.mubr.f32.gmra.mrb[0].mxu0 %v1950
        %v2159 = vpop.f32.mrb[0].mxu0
        %v2160 = vadd.f32 0.0, %v2159
        %v2161 = vpop.f32.mrb[0].mxu0
        %2162 = vmatprep.mubr.f32.mxu0 0.0
        %2163 = vmatmul.mubr.f32.gmra.mrb[0].mxu0 %v1953
        %v2164 = vpop.f32.mrb[0].mxu0
        %v2165 = vadd.f32 0.0, %v2164
        %v2166 = vpop.f32.mrb[0].mxu0
        %2167 = vmatprep.mubr.f32.mxu0 0.0
        %2168 = vmatmul.mubr.f32.gmra.mrb[0].mxu0 %v1956
        %v2169 = vpop.f32.mrb[0].mxu0
        %v2170 = vadd.f32 0.0, %v2169
        %v2171 = vpop.f32.mrb[0].mxu0
        %2172 = vmatprep.mubr.f32.mxu0 0.0
        %2173 = vmatmul.mubr.f32.gmra.mrb[0].mxu0 %v1959
        %v2174 = vpop.f32.mrb[0].mxu0
        %v2175 = vadd.f32 0.0, %v2174
        %v2176 = vpop.f32.mrb[0].mxu0
        %2177 = vmatprep.mubr.f32.mxu0 0.0
        %2178 = vmatmul.mubr.f32.gmra.mrb[0].mxu0 %v1962
        %v2179 = vpop.f32.mrb[0].mxu0
        %v2180 = vadd.f32 0.0, %v2179
        %v2181 = vpop.f32.mrb[0].mxu0
        %2182 = vmatprep.mubr.f32.mxu0 0.0
        %2183 = vmatmul.mubr.f32.gmra.mrb[0].mxu0 %v1965
        %v2184 = vpop.f32.mrb[0].mxu0
        %v2185 = vadd.f32 0.0, %v2184
        %v2186 = vpop.f32.mrb[0].mxu0
        %2187 = vmatprep.mubr.f32.mxu0 0.0
        %2188 = vmatmul.mubr.f32.gmra.mrb[0].mxu0 %v1968
        %v2189 = vpop.f32.mrb[0].mxu0
        %v2190 = vadd.f32 0.0, %v2189
        %v2191 = vpop.f32.mrb[0].mxu0
        %2192 = vmatprep.mubr.f32.mxu0 0.0
        %2193 = vmatmul.mubr.f32.gmra.mrb[0].mxu0 %v1971
        %v2194 = vpop.f32.mrb[0].mxu0
        %v2195 = vadd.f32 0.0, %v2194
        %v2196 = vpop.f32.mrb[0].mxu0
        %2197 = vmatprep.mubr.f32.mxu0 0.0
        %2198 = vmatmul.mubr.f32.gmra.mrb[0].mxu0 %v1974
        %v2199 = vpop.f32.mrb[0].mxu0
        %v2200 = vadd.f32 0.0, %v2199
        %v2201 = vpop.f32.mrb[0].mxu0
        %2202 = vmatprep.mubr.f32.mxu0 0.0
        %2203 = vmatmul.mubr.f32.gmra.mrb[0].mxu0 %v1977
        %v2204 = vpop.f32.mrb[0].mxu0
        %v2205 = vadd.f32 0.0, %v2204
        %v2206 = vpop.f32.mrb[0].mxu0
        %2207 = vdwg.mxu0
        %2208 = vst [vmem:[%s208] sm:$0xff] %v2050
        %2209 = vst [vmem:[%s208 + $0x8] sm:$0xff] %v2055
        %2210 = vst [vmem:[%s208 + $0x10] sm:$0xff] %v2060
        %2211 = vst [vmem:[%s208 + $0x18] sm:$0xff] %v2065
        %2212 = vst [vmem:[%s208 + $0x20] sm:$0xff] %v2070
        %2213 = vst [vmem:[%s208 + $0x28] sm:$0xff] %v2075
        %2214 = vst [vmem:[%s208 + $0x30] sm:$0xff] %v2080
        %2215 = vst [vmem:[%s208 + $0x38] sm:$0xff] %v2085
        %2216 = vst [vmem:[%s208 + $0x40] sm:$0xff] %v2090
        %2217 = vst [vmem:[%s208 + $0x48] sm:$0xff] %v2095
        %2218 = vst [vmem:[%s208 + $0x50] sm:$0xff] %v2100
        %2219 = vst [vmem:[%s208 + $0x58] sm:$0xff] %v2105
        %2220 = vst [vmem:[%s208 + $0x60] sm:$0xff] %v2110
        %2221 = vst [vmem:[%s208 + $0x68] sm:$0xff] %v2115
        %2222 = vst [vmem:[%s208 + $0x70] sm:$0xff] %v2120
        %2223 = vst [vmem:[%s208 + $0x78] sm:$0xff] %v2125
        %2224 = vst [vmem:[%s208 + $0x80] sm:$0xff] %v2130
        %2225 = vst [vmem:[%s208 + $0x88] sm:$0xff] %v2135
        %2226 = vst [vmem:[%s208 + $0x90] sm:$0xff] %v2140
        %2227 = vst [vmem:[%s208 + $0x98] sm:$0xff] %v2145
        %2228 = vst [vmem:[%s208 + $0xa0] sm:$0xff] %v2150
        %2229 = vst [vmem:[%s208 + $0xa8] sm:$0xff] %v2155
        %2230 = vst [vmem:[%s208 + $0xb0] sm:$0xff] %v2160
        %2231 = vst [vmem:[%s208 + $0xb8] sm:$0xff] %v2165
        %2232 = vst [vmem:[%s208 + $0xc0] sm:$0xff] %v2170
        %2233 = vst [vmem:[%s208 + $0xc8] sm:$0xff] %v2175
        %2234 = vst [vmem:[%s208 + $0xd0] sm:$0xff] %v2180
        %2235 = vst [vmem:[%s208 + $0xd8] sm:$0xff] %v2185
        %2236 = vst [vmem:[%s208 + $0xe0] sm:$0xff] %v2190
        %2237 = vst [vmem:[%s208 + $0xe8] sm:$0xff] %v2195
        %2238 = vst [vmem:[%s208 + $0xf0] sm:$0xff] %v2200
        %2239 = vst [vmem:[%s208 + $0xf8] sm:$0xff] %v2205
        %p2240 = scmp.eq.s32.totalorder %s27, 0
        // Predicated region
        $region29: #{tpu_custom_call.1} parent=27 // pred_check
          %p2241 = pneg %p2240
        $region30: #{tpu_custom_call.1} parent=27 // pred_check_branch
          %2243 = sbr.rel (%p2241) target = $region32
        $region31: #{tpu_custom_call.1} parent=27 // pred_region
          %2244 = vst [vmem:[%s214] sm:$0x1] 0.0
          %2245 = vst [vmem:[%s220] sm:$0x1] 0.0
        $region32: #{tpu_custom_call.1} parent=27 // pred_fallthru
          _
        %v2246 = vld [vmem:[%s214] sm:$0x1]
        %v2247 = vadd.f32 %v2050, %v2055
        %v2248 = vadd.f32 %v2247, %v2060
        %v2249 = vadd.f32 %v2248, %v2065
        %v2250 = vadd.f32 %v2249, %v2070
        %v2251 = vadd.f32 %v2250, %v2075
        %v2252 = vadd.f32 %v2251, %v2080
        %v2253 = vadd.f32 %v2252, %v2085
        %v2254 = vadd.f32 %v2253, %v2090
        %v2255 = vadd.f32 %v2254, %v2095
        %v2256 = vadd.f32 %v2255, %v2100
        %v2257 = vadd.f32 %v2256, %v2105
        %v2258 = vadd.f32 %v2257, %v2110
        %v2259 = vadd.f32 %v2258, %v2115
        %v2260 = vadd.f32 %v2259, %v2120
        %v2261 = vadd.f32 %v2260, %v2125
        %v2262 = vadd.f32 %v2261, %v2130
        %v2263 = vadd.f32 %v2262, %v2135
        %v2264 = vadd.f32 %v2263, %v2140
        %v2265 = vadd.f32 %v2264, %v2145
        %v2266 = vadd.f32 %v2265, %v2150
        %v2267 = vadd.f32 %v2266, %v2155
        %v2268 = vadd.f32 %v2267, %v2160
        %v2269 = vadd.f32 %v2268, %v2165
        %v2270 = vadd.f32 %v2269, %v2170
        %v2271 = vadd.f32 %v2270, %v2175
        %v2272 = vadd.f32 %v2271, %v2180
        %v2273 = vadd.f32 %v2272, %v2185
        %v2274 = vadd.f32 %v2273, %v2190
        %v2275 = vadd.f32 %v2274, %v2195
        %v2276 = vadd.f32 %v2275, %v2200
        %v2277 = vadd.f32 %v2276, %v2205
        %v2278 = vrot.slane %v2277, 4
        %v2279 = vadd.f32 %v2277, %v2278
        %v2280 = vrot.slane %v2279, 2
        %v2281 = vadd.f32 %v2279, %v2280
        %v2282 = vrot.slane %v2281, 1
        %v2283 = vadd.f32 %v2281, %v2282
        %v2284 = vadd.f32 %v2246, %v2283
        %2285 = vst [vmem:[%s214] sm:$0x1] %v2284
        %v2286 = vld [vmem:[%s220] sm:$0x1]
        %v2287 = vmul.f32 %v2050, %v2050
        %v2288 = vmul.f32 %v2055, %v2055
        %v2289 = vmul.f32 %v2060, %v2060
        %v2290 = vmul.f32 %v2065, %v2065
        %v2291 = vmul.f32 %v2070, %v2070
        %v2292 = vmul.f32 %v2075, %v2075
        %v2293 = vmul.f32 %v2080, %v2080
        %v2294 = vmul.f32 %v2085, %v2085
        %v2295 = vmul.f32 %v2090, %v2090
        %v2296 = vmul.f32 %v2095, %v2095
        %v2297 = vmul.f32 %v2100, %v2100
        %v2298 = vmul.f32 %v2105, %v2105
        %v2299 = vmul.f32 %v2110, %v2110
        %v2300 = vmul.f32 %v2115, %v2115
        %v2301 = vmul.f32 %v2120, %v2120
        %v2302 = vmul.f32 %v2125, %v2125
        %v2303 = vmul.f32 %v2130, %v2130
        %v2304 = vmul.f32 %v2135, %v2135
        %v2305 = vmul.f32 %v2140, %v2140
        %v2306 = vmul.f32 %v2145, %v2145
        %v2307 = vmul.f32 %v2150, %v2150
        %v2308 = vmul.f32 %v2155, %v2155
        %v2309 = vmul.f32 %v2160, %v2160
        %v2310 = vmul.f32 %v2165, %v2165
        %v2311 = vmul.f32 %v2170, %v2170
        %v2312 = vmul.f32 %v2175, %v2175
        %v2313 = vmul.f32 %v2180, %v2180
        %v2314 = vmul.f32 %v2185, %v2185
        %v2315 = vmul.f32 %v2190, %v2190
        %v2316 = vmul.f32 %v2195, %v2195
        %v2317 = vmul.f32 %v2200, %v2200
        %v2318 = vmul.f32 %v2205, %v2205
        %v2319 = vadd.f32 %v2287, %v2288
        %v2320 = vadd.f32 %v2319, %v2289
        %v2321 = vadd.f32 %v2320, %v2290
        %v2322 = vadd.f32 %v2321, %v2291
        %v2323 = vadd.f32 %v2322, %v2292
        %v2324 = vadd.f32 %v2323, %v2293
        %v2325 = vadd.f32 %v2324, %v2294
        %v2326 = vadd.f32 %v2325, %v2295
        %v2327 = vadd.f32 %v2326, %v2296
        %v2328 = vadd.f32 %v2327, %v2297
        %v2329 = vadd.f32 %v2328, %v2298
        %v2330 = vadd.f32 %v2329, %v2299
        %v2331 = vadd.f32 %v2330, %v2300
        %v2332 = vadd.f32 %v2331, %v2301
        %v2333 = vadd.f32 %v2332, %v2302
        %v2334 = vadd.f32 %v2333, %v2303
        %v2335 = vadd.f32 %v2334, %v2304
        %v2336 = vadd.f32 %v2335, %v2305
        %v2337 = vadd.f32 %v2336, %v2306
        %v2338 = vadd.f32 %v2337, %v2307
        %v2339 = vadd.f32 %v2338, %v2308
        %v2340 = vadd.f32 %v2339, %v2309
        %v2341 = vadd.f32 %v2340, %v2310
        %v2342 = vadd.f32 %v2341, %v2311
        %v2343 = vadd.f32 %v2342, %v2312
        %v2344 = vadd.f32 %v2343, %v2313
        %v2345 = vadd.f32 %v2344, %v2314
        %v2346 = vadd.f32 %v2345, %v2315
        %v2347 = vadd.f32 %v2346, %v2316
        %v2348 = vadd.f32 %v2347, %v2317
        %v2349 = vadd.f32 %v2348, %v2318
        %v2350 = vrot.slane %v2349, 4
        %v2351 = vadd.f32 %v2349, %v2350
        %v2352 = vrot.slane %v2351, 2
        %v2353 = vadd.f32 %v2351, %v2352
        %v2354 = vrot.slane %v2353, 1
        %v2355 = vadd.f32 %v2353, %v2354
        %v2356 = vadd.f32 %v2286, %v2355
        %2357 = vst [vmem:[%s220] sm:$0x1] %v2356
        %s2358 = sand.u32 %s91, 1
        %s2359 = scalar_lea.sflag [#allocation4], %s2358
        %s2360 = sand.u32 %s91, 1
        %s2361 = smul.addr %s2360, 256
        %s2362 = scalar_lea.vmem [#allocation3], %s2361
        %s2363 = sand.u32 %s22, 1
        %s2364 = scalar_lea.sflag [#allocation6], %s2363
        %s2365 = sand.u32 %s117, 1
        %s2366 = scalar_lea.vmem [#allocation5], %s2365
        %s2367 = sand.u32 %s22, 1
        %s2368 = scalar_lea.sflag [#allocation6], %s2367
        %s2369 = sand.u32 %s143, 1
        %s2370 = scalar_lea.vmem [#allocation7], %s2369
        // Predicated region
        $region33: #{tpu_custom_call.1} parent=27 // pred_check
          %p2371 = pneg %p101
        $region34: #{tpu_custom_call.1} parent=27 // pred_check_branch
          %2373 = sbr.rel (%p2371) target = $region36
        $region35: #{tpu_custom_call.1} parent=27 // pred_region
          %s2374 = smul.u32 32, %s27
          %s2376 = ssub.s32 4096, 4096
          %2377 = vsyncadd %s2359, %s2376
          %s2378 = smul.addr %s26, 32
          %s2379 = sadd.s32 %s2374, %s2378
          %s2380 = smul.addr %s2379, 128
          %s2381 = scalar_lea.hbm %s2, %s2380
          %s2382 = sshll.u32 %s2362, 4
          %s2383 = int_to_ptr.vmem [resolvable:$true] %s2382
          %2388 = dma.vmem_to_hbm [thread:$0]  %s2383, 4096, %s2381, %s2359, 128, 128, 8
        $region36: #{tpu_custom_call.1} parent=27 // pred_fallthru
          _
        // Predicated region
        $region37: #{tpu_custom_call.1} parent=27 // pred_check
          %p2389 = pneg %p127
        $region38: #{tpu_custom_call.1} parent=27 // pred_check_branch
          %2391 = sbr.rel (%p2389) target = $region40
        $region39: #{tpu_custom_call.1} parent=27 // pred_region
          %s2393 = ssub.s32 16, 16
          %2394 = vsyncadd %s2364, %s2393
          %s2395 = smul.addr %s26, 16
          %s2396 = scalar_lea.hbm %s3, %s2395
          %s2398 = sshll.u32 %s2366, 4
          %s2399 = int_to_ptr.vmem [resolvable:$true] %s2398
          %2401 = dma.vmem_to_hbm [thread:$0]  %s2399, 16, %s2396, %s2364
        $region40: #{tpu_custom_call.1} parent=27 // pred_fallthru
          _
        // Predicated region
        $region41: #{tpu_custom_call.1} parent=27 // pred_check
          %p2402 = pneg %p153
        $region42: #{tpu_custom_call.1} parent=27 // pred_check_branch
          %2404 = sbr.rel (%p2402) target = $region44
        $region43: #{tpu_custom_call.1} parent=27 // pred_region
          %s2406 = ssub.s32 16, 16
          %2407 = vsyncadd %s2368, %s2406
          %s2408 = smul.addr %s26, 16
          %s2409 = scalar_lea.hbm %s4, %s2408
          %s2411 = sshll.u32 %s2370, 4
          %s2412 = int_to_ptr.vmem [resolvable:$true] %s2411
          %2414 = dma.vmem_to_hbm [thread:$0]  %s2412, 16, %s2409, %s2368
        $region44: #{tpu_custom_call.1} parent=27 // pred_fallthru
          _
      $region28: #{tpu_custom_call.1} parent=5 // pred_fallthru
        _
      %p2415 = scmp.le.s32.totalorder 2, %s17
      // Predicated region
      $region45: #{tpu_custom_call.1} parent=5 // pred_check
        %p2416 = pneg %p2415
      $region46: #{tpu_custom_call.1} parent=5 // pred_check_branch
        %2418 = sbr.rel (%p2416) target = $region48
      $region47: #{tpu_custom_call.1} parent=5 // pred_region
        %s2419 = ssub.s32 %s17, 2
        // Predicated region
        $region49: #{tpu_custom_call.1} parent=47 // pred_check
          %p2420 = pneg %p107
        $region50: #{tpu_custom_call.1} parent=47 // pred_check_branch
          %2422 = sbr.rel (%p2420) target = $region52
        $region51: #{tpu_custom_call.1} parent=47 // pred_region
          %s2423 = sand.u32 %s92, 1
          %s2424 = scalar_lea.sflag [#allocation4], %s2423
          %s2425 = sand.u32 %s92, 1
          %s2426 = smul.addr %s2425, 256
          %s2427 = scalar_lea.vmem [#allocation3], %s2426
          %2428 = dma.done %s2424, 4096
        $region52: #{tpu_custom_call.1} parent=47 // pred_fallthru
          _
        // Predicated region
        $region53: #{tpu_custom_call.1} parent=47 // pred_check
          %p2429 = pneg %p133
        $region54: #{tpu_custom_call.1} parent=47 // pred_check_branch
          %2431 = sbr.rel (%p2429) target = $region56
        $region55: #{tpu_custom_call.1} parent=47 // pred_region
          %s2432 = sand.u32 %s23, 1
          %s2433 = scalar_lea.sflag [#allocation6], %s2432
          %s2434 = sand.u32 %s118, 1
          %s2435 = scalar_lea.vmem [#allocation5], %s2434
          %2436 = dma.done %s2433, 16
        $region56: #{tpu_custom_call.1} parent=47 // pred_fallthru
          _
        // Predicated region
        $region57: #{tpu_custom_call.1} parent=47 // pred_check
          %p2437 = pneg %p159
        $region58: #{tpu_custom_call.1} parent=47 // pred_check_branch
          %2439 = sbr.rel (%p2437) target = $region60
        $region59: #{tpu_custom_call.1} parent=47 // pred_region
          %s2440 = sand.u32 %s23, 1
          %s2441 = scalar_lea.sflag [#allocation6], %s2440
          %s2442 = sand.u32 %s144, 1
          %s2443 = scalar_lea.vmem [#allocation7], %s2442
          %2444 = dma.done %s2441, 16
        $region60: #{tpu_custom_call.1} parent=47 // pred_fallthru
          _
      $region48: #{tpu_custom_call.1} parent=5 // pred_fallthru
        _
    $region6: #{tpu_custom_call.1} parent=1 // loop_footer
      %s21 = sadd.s32 1, %s17
    $region7: #{tpu_custom_call.1} parent=1 // loop_footer_branch
      %16 = sbr.rel target = $region3
    $region8: #{tpu_custom_call.1} parent=1 // loop_exit
      _
    %2445 = vsyncpa [#allocation4], 1
    %s2446 = scalar_lea.sflag [#allocation4], 1
    %2447 = vsyncpa %s2446, 1
    %2448 = vsyncpa [#allocation6], 1
    %s2449 = scalar_lea.sflag [#allocation6], 1
    %2450 = vsyncpa %s2449, 1

</llo_original>
